<compile_context>
chip_gen: v6e
topology: v6e:2x2x1
jax: 0.10.0
libtpu: 0.0.40
codegen_flags: <defaults>
</compile_context>

<pallas_src>
import jax
import jax.numpy as jnp
from jax.experimental import pallas as pl
from jax.experimental.pallas import tpu as pltpu


def _round_up(n, m):
    return ((n + m - 1) // m) * m


def _silu_f32(z):
    # SiLU(z) = z * sigmoid(z); exp + approx-reciprocal both run on the EUP.
    return z * pl.reciprocal(1.0 + jnp.exp(-z), approx=True)


def pg_network_kernel(x_ref, w1_ref, b1_ref, w2_ref, b2_ref,
                      wh_ref, bh_ref, out_ref):
    x = x_ref[...]                                                    # (tb, K_pad) bf16

    # Layer 1: Linear(input_size -> 512) + SiLU (f32 accumulate / activation)
    h = jnp.dot(x, w1_ref[...], preferred_element_type=jnp.float32) + b1_ref[...]
    h = _silu_f32(h)

    # Layer 2: Linear(512 -> 512) + SiLU
    # TODO(synk): optional fp8 path for w2 on v7x inference (MXU fp8) not implemented.
    h = jnp.dot(h.astype(jnp.bfloat16), w2_ref[...],
                preferred_element_type=jnp.float32) + b2_ref[...]
    h = _silu_f32(h)

    # Fused heads: [policy | value | zero-pad] -> lane-dense (tb, N_pad) output.
    out_ref[...] = (jnp.dot(h.astype(jnp.bfloat16), wh_ref[...],
                            preferred_element_type=jnp.float32) + bh_ref[...])


def pg_network_forward(x, params, *, tile_b=256):
    """PGNetworkA forward in one Pallas kernel.

    x: (B, input_size) float32
    params: dict with w1 (in,512), b1 (1,512), w2 (512,512), b2 (1,512),
            wh (512,out), bh (1,out), wv (512,1), bv (1,1)
    returns: (prob (B,out), v (B,1)) in float32
    """
    B, input_size = x.shape
    H = params["w1"].shape[1]
    out_size = params["wh"].shape[1]

    K_pad = _round_up(max(input_size, 128), 128)        # lane-dense K for layer 1
    n_fused = out_size + 1                              # policy cols + 1 value col
    N_pad = _round_up(max(n_fused, 128), 128)           # lane-dense fused head width

    # Batch tiling: small B -> single tile rounded to a multiple of 16 (bf16
    # sublane packing); large B -> tile_b-row tiles, pipelined over a grid.
    if B <= tile_b:
        tb = _round_up(B, 16)
    else:
        tb = tile_b
    B_pad = _round_up(B, tb)

    f32 = jnp.float32
    bf16 = jnp.bfloat16

    # --- pack / pad / cast operands (all zero padding -> sliced off below) ---
    x_p = jnp.zeros((B_pad, K_pad), bf16).at[:B, :input_size].set(x.astype(bf16))

    w1 = jnp.zeros((K_pad, H), bf16).at[:input_size, :].set(params["w1"].astype(bf16))
    b1 = params["b1"].astype(f32).reshape(1, H)
    w2 = params["w2"].astype(bf16)
    b2 = params["b2"].astype(f32).reshape(1, H)

    w_head = jnp.zeros((H, N_pad), bf16)
    w_head = w_head.at[:, :out_size].set(params["wh"].astype(bf16))
    w_head = w_head.at[:, out_size:out_size + 1].set(params["wv"].astype(bf16))
    b_head = jnp.zeros((1, N_pad), f32)
    b_head = b_head.at[:, :out_size].set(params["bh"].astype(f32).reshape(1, out_size))
    b_head = b_head.at[:, out_size:out_size + 1].set(params["bv"].astype(f32).reshape(1, 1))

    grid = (B_pad // tb,)

    out = pl.pallas_call(
        pg_network_kernel,
        out_shape=jax.ShapeDtypeStruct((B_pad, N_pad), f32),
        grid_spec=pltpu.PrefetchScalarGridSpec(
            num_scalar_prefetch=0,
            grid=grid,
            in_specs=[
                pl.BlockSpec((tb, K_pad), lambda i: (i, 0)),    # x tile (pipelined)
                pl.BlockSpec((K_pad, H), lambda i: (0, 0)),     # w1 (resident)
                pl.BlockSpec((1, H), lambda i: (0, 0)),         # b1
                pl.BlockSpec((H, H), lambda i: (0, 0)),         # w2 (resident)
                pl.BlockSpec((1, H), lambda i: (0, 0)),         # b2
                pl.BlockSpec((H, N_pad), lambda i: (0, 0)),     # fused head W
                pl.BlockSpec((1, N_pad), lambda i: (0, 0)),     # fused head b
            ],
            out_specs=pl.BlockSpec((tb, N_pad), lambda i: (i, 0)),
        ),
        compiler_params=pltpu.CompilerParams(
            dimension_semantics=("parallel",),   # shard batch tiles across TCs (v7x)
        ),
    )(x_p, w1, b1, w2, b2, w_head, b_head)

    prob = out[:B, :out_size]
    v = out[:B, out_size:out_size + 1]
    return prob, v


def init_params(key, input_size, output_size, hidden=512):
    """Deterministic init mimicking PyTorch nn.Linear default (U[-1/sqrt(fan_in), +])."""
    ks = jax.random.split(key, 8)

    def lin(kw, kb, fan_in, fan_out):
        bound = 1.0 / jnp.sqrt(float(fan_in))
        w = jax.random.uniform(kw, (fan_in, fan_out), jnp.float32, -bound, bound)
        b = jax.random.uniform(kb, (1, fan_out), jnp.float32, -bound, bound)
        return w, b

    w1, b1 = lin(ks[0], ks[1], input_size, hidden)
    w2, b2 = lin(ks[2], ks[3], hidden, hidden)
    wh, bh = lin(ks[4], ks[5], hidden, output_size)
    wv, bv = lin(ks[6], ks[7], hidden, 1)
    return dict(w1=w1, b1=b1, w2=w2, b2=b2, wh=wh, bh=bh, wv=wv, bv=bv)


def reference_forward(x, p):
    def silu(z):
        return z * jax.nn.sigmoid(z)
    h = silu(x @ p["w1"] + p["b1"])
    h = silu(h @ p["w2"] + p["b2"])
    return h @ p["wh"] + p["bh"], h @ p["wv"] + p["bv"]


if __name__ == "__main__":
    key = jax.random.PRNGKey(0)
    k_x, k_p = jax.random.split(key)

    B, input_size, output_size = 8, 32, 8
    x = jax.random.normal(k_x, (B, input_size), jnp.float32)
    params = init_params(k_p, input_size, output_size)

    prob, v = pg_network_forward(x, params)
    jax.block_until_ready((prob, v))

    # Sanity check against pure-f32 JAX reference (looser tol due to bf16 matmuls).
    prob_ref, v_ref = reference_forward(x, params)
    assert prob.shape == (B, output_size) and v.shape == (B, 1)
    assert jnp.allclose(prob, prob_ref, atol=5e-2, rtol=5e-2), (
        float(jnp.max(jnp.abs(prob - prob_ref))))
    assert jnp.allclose(v, v_ref, atol=5e-2, rtol=5e-2), (
        float(jnp.max(jnp.abs(v - v_ref))))

    print("KERNEL_OK")
</pallas_src>

<mosaic_0001>
module attributes {stable_mosaic.version = 11 : i64} {
  func.func @pg_network_kernel(%arg0: i32, %arg1: memref<16x128xbf16, #tpu.memory_space<vmem>>, %arg2: memref<128x512xbf16, #tpu.memory_space<vmem>>, %arg3: memref<1x512xf32, #tpu.memory_space<vmem>>, %arg4: memref<512x512xbf16, #tpu.memory_space<vmem>>, %arg5: memref<1x512xf32, #tpu.memory_space<vmem>>, %arg6: memref<512x128xbf16, #tpu.memory_space<vmem>>, %arg7: memref<1x128xf32, #tpu.memory_space<vmem>>, %arg8: memref<16x128xf32, #tpu.memory_space<vmem>>) attributes {dimension_semantics = [#tpu.dimension_semantics<parallel>], iteration_bounds = array<i64: 1>, scalar_prefetch = 0 : i64, scratch_operands = 0 : i64, tpu.core_type = #tpu.core_type<tc>, window_params = [{transform_indices = @transform_0, window_bounds = array<i64: 16, 128>}, {pipeline_mode = #tpu.pipeline_mode<synchronous>, transform_indices = @transform_1, window_bounds = array<i64: 128, 512>}, {pipeline_mode = #tpu.pipeline_mode<synchronous>, transform_indices = @transform_2, window_bounds = array<i64: 1, 512>}, {pipeline_mode = #tpu.pipeline_mode<synchronous>, transform_indices = @transform_3, window_bounds = array<i64: 512, 512>}, {pipeline_mode = #tpu.pipeline_mode<synchronous>, transform_indices = @transform_4, window_bounds = array<i64: 1, 512>}, {pipeline_mode = #tpu.pipeline_mode<synchronous>, transform_indices = @transform_5, window_bounds = array<i64: 512, 128>}, {pipeline_mode = #tpu.pipeline_mode<synchronous>, transform_indices = @transform_6, window_bounds = array<i64: 1, 128>}, {transform_indices = @transform_7, window_bounds = array<i64: 16, 128>}]} {
    %c0 = arith.constant 0 : index
    %c0_0 = arith.constant 0 : index
    %0 = vector.load %arg1[%c0, %c0_0] : memref<16x128xbf16, #tpu.memory_space<vmem>>, vector<16x128xbf16>
    %c0_1 = arith.constant 0 : index
    %c0_2 = arith.constant 0 : index
    %1 = vector.load %arg2[%c0_1, %c0_2] : memref<128x512xbf16, #tpu.memory_space<vmem>>, vector<128x512xbf16>
    %cst = arith.constant dense<0.000000e+00> : vector<16x512xf32>
    %2 = tpu.matmul %0, %1, %cst {dimension_numbers = #tpu.dot_dimension_numbers<[1], [0], [0], [1], [0, 0, 1, 1], [], []>} : vector<16x128xbf16>, vector<128x512xbf16>, vector<16x512xf32> -> vector<16x512xf32>
    %c0_3 = arith.constant 0 : index
    %c0_4 = arith.constant 0 : index
    %3 = vector.load %arg3[%c0_3, %c0_4] : memref<1x512xf32, #tpu.memory_space<vmem>>, vector<1x512xf32>
    %4 = vector.broadcast %3 : vector<1x512xf32> to vector<16x512xf32>
    %5 = arith.addf %2, %4 : vector<16x512xf32>
    %cst_5 = arith.constant 0.000000e+00 : f32
    %6 = vector.broadcast %cst_5 : f32 to vector<16x512xf32>
    %7 = arith.subf %6, %5 : vector<16x512xf32>
    %8 = math.exp %7 : vector<16x512xf32>
    %cst_6 = arith.constant 1.000000e+00 : f32
    %9 = vector.broadcast %cst_6 : f32 to vector<16x512xf32>
    %10 = arith.addf %9, %8 : vector<16x512xf32>
    %11 = tpu.reciprocal %10 {approx = true} : vector<16x512xf32> -> vector<16x512xf32>
    %12 = arith.mulf %5, %11 : vector<16x512xf32>
    %13 = arith.truncf %12 : vector<16x512xf32> to vector<16x512xbf16>
    %c0_7 = arith.constant 0 : index
    %c0_8 = arith.constant 0 : index
    %14 = vector.load %arg4[%c0_7, %c0_8] : memref<512x512xbf16, #tpu.memory_space<vmem>>, vector<512x512xbf16>
    %cst_9 = arith.constant dense<0.000000e+00> : vector<16x512xf32>
    %15 = tpu.matmul %13, %14, %cst_9 {dimension_numbers = #tpu.dot_dimension_numbers<[1], [0], [0], [1], [0, 0, 1, 1], [], []>} : vector<16x512xbf16>, vector<512x512xbf16>, vector<16x512xf32> -> vector<16x512xf32>
    %c0_10 = arith.constant 0 : index
    %c0_11 = arith.constant 0 : index
    %16 = vector.load %arg5[%c0_10, %c0_11] : memref<1x512xf32, #tpu.memory_space<vmem>>, vector<1x512xf32>
    %17 = vector.broadcast %16 : vector<1x512xf32> to vector<16x512xf32>
    %18 = arith.addf %15, %17 : vector<16x512xf32>
    %cst_12 = arith.constant 0.000000e+00 : f32
    %19 = vector.broadcast %cst_12 : f32 to vector<16x512xf32>
    %20 = arith.subf %19, %18 : vector<16x512xf32>
    %21 = math.exp %20 : vector<16x512xf32>
    %cst_13 = arith.constant 1.000000e+00 : f32
    %22 = vector.broadcast %cst_13 : f32 to vector<16x512xf32>
    %23 = arith.addf %22, %21 : vector<16x512xf32>
    %24 = tpu.reciprocal %23 {approx = true} : vector<16x512xf32> -> vector<16x512xf32>
    %25 = arith.mulf %18, %24 : vector<16x512xf32>
    %26 = arith.truncf %25 : vector<16x512xf32> to vector<16x512xbf16>
    %c0_14 = arith.constant 0 : index
    %c0_15 = arith.constant 0 : index
    %27 = vector.load %arg6[%c0_14, %c0_15] : memref<512x128xbf16, #tpu.memory_space<vmem>>, vector<512x128xbf16>
    %cst_16 = arith.constant dense<0.000000e+00> : vector<16x128xf32>
    %28 = tpu.matmul %26, %27, %cst_16 {dimension_numbers = #tpu.dot_dimension_numbers<[1], [0], [0], [1], [0, 0, 1, 1], [], []>} : vector<16x512xbf16>, vector<512x128xbf16>, vector<16x128xf32> -> vector<16x128xf32>
    %c0_17 = arith.constant 0 : index
    %c0_18 = arith.constant 0 : index
    %29 = vector.load %arg7[%c0_17, %c0_18] : memref<1x128xf32, #tpu.memory_space<vmem>>, vector<1x128xf32>
    %30 = vector.broadcast %29 : vector<1x128xf32> to vector<16x128xf32>
    %31 = arith.addf %28, %30 : vector<16x128xf32>
    %c0_19 = arith.constant 0 : index
    %c0_20 = arith.constant 0 : index
    %32 = vector.load %arg8[%c0_19, %c0_20] : memref<16x128xf32, #tpu.memory_space<vmem>>, vector<16x128xf32>
    tpu.vector_store %arg8[%c0_19, %c0_20], %31 {strides = array<i32>} : memref<16x128xf32, #tpu.memory_space<vmem>>, vector<16x128xf32>,
    return
  }
  func.func @transform_0(%arg0: i32) -> (i32, i32) {
    %c0_i32 = arith.constant 0 : i32
    %c0_i32_0 = arith.constant 0 : i32
    return %arg0, %c0_i32 : i32, i32
  }
  func.func @transform_1(%arg0: i32) -> (i32, i32) {
    %c0_i32 = arith.constant 0 : i32
    %c0_i32_0 = arith.constant 0 : i32
    %c0_i32_1 = arith.constant 0 : i32
    return %c0_i32, %c0_i32_0 : i32, i32
  }
  func.func @transform_2(%arg0: i32) -> (i32, i32) {
    %c0_i32 = arith.constant 0 : i32
    %c0_i32_0 = arith.constant 0 : i32
    %c0_i32_1 = arith.constant 0 : i32
    return %c0_i32, %c0_i32_0 : i32, i32
  }
  func.func @transform_3(%arg0: i32) -> (i32, i32) {
    %c0_i32 = arith.constant 0 : i32
    %c0_i32_0 = arith.constant 0 : i32
    %c0_i32_1 = arith.constant 0 : i32
    return %c0_i32, %c0_i32_0 : i32, i32
  }
  func.func @transform_4(%arg0: i32) -> (i32, i32) {
    %c0_i32 = arith.constant 0 : i32
    %c0_i32_0 = arith.constant 0 : i32
    %c0_i32_1 = arith.constant 0 : i32
    return %c0_i32, %c0_i32_0 : i32, i32
  }
  func.func @transform_5(%arg0: i32) -> (i32, i32) {
    %c0_i32 = arith.constant 0 : i32
    %c0_i32_0 = arith.constant 0 : i32
    %c0_i32_1 = arith.constant 0 : i32
    return %c0_i32, %c0_i32_0 : i32, i32
  }
  func.func @transform_6(%arg0: i32) -> (i32, i32) {
    %c0_i32 = arith.constant 0 : i32
    %c0_i32_0 = arith.constant 0 : i32
    %c0_i32_1 = arith.constant 0 : i32
    return %c0_i32, %c0_i32_0 : i32, i32
  }
  func.func @transform_7(%arg0: i32) -> (i32, i32) {
    %c0_i32 = arith.constant 0 : i32
    %c0_i32_0 = arith.constant 0 : i32
    return %arg0, %c0_i32 : i32, i32
  }
}

</mosaic_0001>

<llo_original>
// kernel: tpu_custom_call.1
$region0: #{tpu_custom_call.1}
  #allocation0 [shape = 'u32[]', space=smem, size = 0x4, offset = 0x4, fixed_abs, tag = 'smem constant byte address 0x4 - core index']
  #allocation1 [shape = 'u32[144,128]{1,0:T(1,128)}', space=vmem, size = 0x12000, scoped, tag = 'internal scratch']
  %s0 = inlined_call_operand.hbm [shape: bf16[16,128], index: 0, kind: input, shape index: {}]
  %s1 = inlined_call_operand.hbm [shape: bf16[128,512], index: 1, kind: input, shape index: {}]
  %s2 = inlined_call_operand.hbm [shape: f32[1,512], index: 2, kind: input, shape index: {}]
  %s3 = inlined_call_operand.hbm [shape: bf16[512,512], index: 3, kind: input, shape index: {}]
  %s4 = inlined_call_operand.vmem [shape: f32[1,512], index: 4, kind: input, shape index: {}]
  %s5 = inlined_call_operand.hbm [shape: bf16[512,128], index: 5, kind: input, shape index: {}]
  %s6 = inlined_call_operand.vmem [shape: f32[1,128], index: 6, kind: input, shape index: {}]
  %s7 = inlined_call_operand.hbm [shape: f32[16,128], index: 7, kind: output, shape index: {}]
  %s8 = sld [smem:[#allocation0]]
  $region58: #{tpu_custom_call.1} parent=0
    _
  %s10 = ssub.s32 1, %s8
  %s11 = scalar_select 0, %s10, %s8
  $region1: #{tpu_custom_call.1} parent=0
    #allocation2 [shape = 'u8[4096]{0}', space=vmem, size = 0x1000, scoped, tag = 'input window, operand 0, single buffered']
    #allocation3 [shape = 's32[1]{0}', space=sflag, size = 0x4, scoped, tag = 'scoped memory for tpu_custom_call.1']
    #allocation4 [shape = 's32[1]{0}', space=sflag, size = 0x4, scoped, tag = 'scoped memory for tpu_custom_call.1']
    #allocation5 [shape = 'u8[131072]{0}', space=vmem, size = 0x20000, scoped, tag = 'input window, operand 1, single buffered']
    #allocation6 [shape = 's32[1]{0}', space=sflag, size = 0x4, scoped, tag = 'scoped memory for tpu_custom_call.1']
    #allocation7 [shape = 'u8[2048]{0}', space=vmem, size = 0x800, scoped, tag = 'input window, operand 2, single buffered']
    #allocation8 [shape = 'u8[524288]{0}', space=vmem, size = 0x80000, scoped, tag = 'input window, operand 3, single buffered']
    #allocation9 [shape = 's32[1]{0}', space=sflag, size = 0x4, scoped, tag = 'scoped memory for tpu_custom_call.1']
    #allocation10 [shape = 'u8[131072]{0}', space=vmem, size = 0x20000, scoped, tag = 'input window, operand 5, single buffered']
    #allocation11 [shape = 'u8[8192]{0}', space=vmem, size = 0x2000, scoped, tag = 'output window, operand 0, single buffered']
    %12 = vsyncpa [#allocation3], 0
    %13 = vsyncpa [#allocation6], 0
    %14 = vsyncpa [#allocation9], 0
    %15 = vsyncpa [#allocation4], 0
    // Predicated region
    $region2: #{tpu_custom_call.1} parent=1 // pred_check
      _
    $region3: #{tpu_custom_call.1} parent=1 // pred_check_branch
      %17 = sbr.rel (0) target = $region5
    $region4: #{tpu_custom_call.1} parent=1 // pred_region
      %s19 = ssub.s32 128, 128
      %20 = vsyncadd [#allocation3], %s19
      %s21 = sshll.u32 [#allocation2], 4
      %s22 = int_to_ptr.vmem [resolvable:$true] %s21
      %27 = dma.hbm_to_vmem [thread:$0]  %s0, 128, %s22, [#allocation3], 64, 64, 4
    $region5: #{tpu_custom_call.1} parent=1 // pred_fallthru
      _
    // Predicated region
    $region6: #{tpu_custom_call.1} parent=1 // pred_check
      _
    $region7: #{tpu_custom_call.1} parent=1 // pred_check_branch
      %29 = sbr.rel (0) target = $region9
    $region8: #{tpu_custom_call.1} parent=1 // pred_region
      %s31 = ssub.s32 4096, 4096
      %32 = vsyncadd [#allocation6], %s31
      %s33 = sshll.u32 [#allocation5], 4
      %s34 = int_to_ptr.vmem [resolvable:$true] %s33
      %39 = dma.hbm_to_vmem [thread:$0]  %s1, 4096, %s34, [#allocation6], 256, 256, 16
    $region9: #{tpu_custom_call.1} parent=1 // pred_fallthru
      _
    // Predicated region
    $region10: #{tpu_custom_call.1} parent=1 // pred_check
      _
    $region11: #{tpu_custom_call.1} parent=1 // pred_check_branch
      %41 = sbr.rel (0) target = $region13
    $region12: #{tpu_custom_call.1} parent=1 // pred_region
      %s43 = ssub.s32 64, 64
      %44 = vsyncadd [#allocation6], %s43
      %s46 = sshll.u32 [#allocation7], 4
      %s47 = int_to_ptr.vmem [resolvable:$true] %s46
      %49 = dma.hbm_to_vmem [thread:$0]  %s2, 64, %s47, [#allocation6]
    $region13: #{tpu_custom_call.1} parent=1 // pred_fallthru
      _
    // Predicated region
    $region14: #{tpu_custom_call.1} parent=1 // pred_check
      _
    $region15: #{tpu_custom_call.1} parent=1 // pred_check_branch
      %51 = sbr.rel (0) target = $region17
    $region16: #{tpu_custom_call.1} parent=1 // pred_region
      %s53 = ssub.s32 16384, 16384
      %54 = vsyncadd [#allocation9], %s53
      %s55 = sshll.u32 [#allocation8], 4
      %s56 = int_to_ptr.vmem [resolvable:$true] %s55
      %61 = dma.hbm_to_vmem [thread:$0]  %s3, 16384, %s56, [#allocation9], 256, 256, 16
    $region17: #{tpu_custom_call.1} parent=1 // pred_fallthru
      _
    // Predicated region
    $region18: #{tpu_custom_call.1} parent=1 // pred_check
      _
    $region19: #{tpu_custom_call.1} parent=1 // pred_check_branch
      %63 = sbr.rel (0) target = $region21
    $region20: #{tpu_custom_call.1} parent=1 // pred_region
      _
    $region21: #{tpu_custom_call.1} parent=1 // pred_fallthru
      _
    // Predicated region
    $region22: #{tpu_custom_call.1} parent=1 // pred_check
      _
    $region23: #{tpu_custom_call.1} parent=1 // pred_check_branch
      %65 = sbr.rel (0) target = $region25
    $region24: #{tpu_custom_call.1} parent=1 // pred_region
      %s67 = ssub.s32 4096, 4096
      %68 = vsyncadd [#allocation9], %s67
      %s69 = sshll.u32 [#allocation10], 4
      %s70 = int_to_ptr.vmem [resolvable:$true] %s69
      %75 = dma.hbm_to_vmem [thread:$0]  %s5, 4096, %s70, [#allocation9], 64, 64, 4
    $region25: #{tpu_custom_call.1} parent=1 // pred_fallthru
      _
    // Predicated region
    $region26: #{tpu_custom_call.1} parent=1 // pred_check
      _
    $region27: #{tpu_custom_call.1} parent=1 // pred_check_branch
      %77 = sbr.rel (0) target = $region29
    $region28: #{tpu_custom_call.1} parent=1 // pred_region
      _
    $region29: #{tpu_custom_call.1} parent=1 // pred_fallthru
      _
    // Predicated region
    $region30: #{tpu_custom_call.1} parent=1 // pred_check
      _
    $region31: #{tpu_custom_call.1} parent=1 // pred_check_branch
      %79 = sbr.rel (0) target = $region33
    $region32: #{tpu_custom_call.1} parent=1 // pred_region
      %80 = dma.done [#allocation3], 128
    $region33: #{tpu_custom_call.1} parent=1 // pred_fallthru
      _
    // Predicated region
    $region34: #{tpu_custom_call.1} parent=1 // pred_check
      _
    $region35: #{tpu_custom_call.1} parent=1 // pred_check_branch
      %82 = sbr.rel (0) target = $region37
    $region36: #{tpu_custom_call.1} parent=1 // pred_region
      %83 = dma.done [#allocation6], 4096
    $region37: #{tpu_custom_call.1} parent=1 // pred_fallthru
      _
    // Predicated region
    $region38: #{tpu_custom_call.1} parent=1 // pred_check
      _
    $region39: #{tpu_custom_call.1} parent=1 // pred_check_branch
      %85 = sbr.rel (0) target = $region41
    $region40: #{tpu_custom_call.1} parent=1 // pred_region
      %86 = dma.done [#allocation6], 64
    $region41: #{tpu_custom_call.1} parent=1 // pred_fallthru
      _
    // Predicated region
    $region42: #{tpu_custom_call.1} parent=1 // pred_check
      _
    $region43: #{tpu_custom_call.1} parent=1 // pred_check_branch
      %88 = sbr.rel (0) target = $region45
    $region44: #{tpu_custom_call.1} parent=1 // pred_region
      %89 = dma.done [#allocation9], 16384
    $region45: #{tpu_custom_call.1} parent=1 // pred_fallthru
      _
    // Predicated region
    $region46: #{tpu_custom_call.1} parent=1 // pred_check
      _
    $region47: #{tpu_custom_call.1} parent=1 // pred_check_branch
      %91 = sbr.rel (0) target = $region49
    $region48: #{tpu_custom_call.1} parent=1 // pred_region
      %92 = dma.done [#allocation9], 4096
    $region49: #{tpu_custom_call.1} parent=1 // pred_fallthru
      _
    %v94 = vld [vmem:[#allocation2] sm:$0xf]
    %v95 = vld [vmem:[#allocation2 + $0x4] sm:$0xf]
    %v96 = vld [vmem:[#allocation5] sm:$0xff]
    %v97 = vld [vmem:[#allocation5 + $0x8] sm:$0xff]
    %v98 = vld [vmem:[#allocation5 + $0x10] sm:$0xff]
    %v99 = vld [vmem:[#allocation5 + $0x18] sm:$0xff]
    %v100 = vld [vmem:[#allocation5 + $0x20] sm:$0xff]
    %v101 = vld [vmem:[#allocation5 + $0x28] sm:$0xff]
    %v102 = vld [vmem:[#allocation5 + $0x30] sm:$0xff]
    %v103 = vld [vmem:[#allocation5 + $0x38] sm:$0xff]
    %v104 = vld [vmem:[#allocation5 + $0x40] sm:$0xff]
    %v105 = vld [vmem:[#allocation5 + $0x48] sm:$0xff]
    %v106 = vld [vmem:[#allocation5 + $0x50] sm:$0xff]
    %v107 = vld [vmem:[#allocation5 + $0x58] sm:$0xff]
    %v108 = vld [vmem:[#allocation5 + $0x60] sm:$0xff]
    %v109 = vld [vmem:[#allocation5 + $0x68] sm:$0xff]
    %v110 = vld [vmem:[#allocation5 + $0x70] sm:$0xff]
    %v111 = vld [vmem:[#allocation5 + $0x78] sm:$0xff]
    %v112 = vld [vmem:[#allocation5 + $0x80] sm:$0xff]
    %v113 = vld [vmem:[#allocation5 + $0x88] sm:$0xff]
    %v114 = vld [vmem:[#allocation5 + $0x90] sm:$0xff]
    %v115 = vld [vmem:[#allocation5 + $0x98] sm:$0xff]
    %v116 = vld [vmem:[#allocation5 + $0xa0] sm:$0xff]
    %v117 = vld [vmem:[#allocation5 + $0xa8] sm:$0xff]
    %v118 = vld [vmem:[#allocation5 + $0xb0] sm:$0xff]
    %v119 = vld [vmem:[#allocation5 + $0xb8] sm:$0xff]
    %v120 = vld [vmem:[#allocation5 + $0xc0] sm:$0xff]
    %v121 = vld [vmem:[#allocation5 + $0xc8] sm:$0xff]
    %v122 = vld [vmem:[#allocation5 + $0xd0] sm:$0xff]
    %v123 = vld [vmem:[#allocation5 + $0xd8] sm:$0xff]
    %v124 = vld [vmem:[#allocation5 + $0xe0] sm:$0xff]
    %v125 = vld [vmem:[#allocation5 + $0xe8] sm:$0xff]
    %v126 = vld [vmem:[#allocation5 + $0xf0] sm:$0xff]
    %v127 = vld [vmem:[#allocation5 + $0xf8] sm:$0xff]
    %v128 = vld [vmem:[#allocation7] sm:$0xf]
    %v130 = vlaneseq
    %v131 = vshrl.u32 %v130, 7
    %v132 = vsub.s32 0, %v131
    %v133 = vrot.slane %v128, %v132
    %v134 = vlaneseq
    %v135 = vshrl.u32 %v134, 7
    %v136 = vsub.s32 1, %v135
    %v137 = vrot.slane %v128, %v136
    %v138 = vlaneseq
    %v139 = vshrl.u32 %v138, 7
    %v140 = vsub.s32 2, %v139
    %v141 = vrot.slane %v128, %v140
    %v142 = vlaneseq
    %v143 = vshrl.u32 %v142, 7
    %v144 = vsub.s32 3, %v143
    %v145 = vrot.slane %v128, %v144
    %v152 = vunpack.c.l.b16 %v94
    %v153 = vunpack.c.l.b16 %v95
    %v154 = vpack.c.b16 %v153, %v152
    %v188 = vunpack.c.l.b16 %v96
    %v189 = vunpack.c.h.b16 %v96
    %v190 = vunpack.c.l.b16 %v97
    %v191 = vunpack.c.h.b16 %v97
    %v192 = vunpack.c.l.b16 %v98
    %v193 = vunpack.c.h.b16 %v98
    %v194 = vunpack.c.l.b16 %v99
    %v195 = vunpack.c.h.b16 %v99
    %v196 = vunpack.c.l.b16 %v100
    %v197 = vunpack.c.h.b16 %v100
    %v198 = vunpack.c.l.b16 %v101
    %v199 = vunpack.c.h.b16 %v101
    %v200 = vunpack.c.l.b16 %v102
    %v201 = vunpack.c.h.b16 %v102
    %v202 = vunpack.c.l.b16 %v103
    %v203 = vunpack.c.h.b16 %v103
    %v204 = vunpack.c.l.b16 %v104
    %v205 = vunpack.c.h.b16 %v104
    %v206 = vunpack.c.l.b16 %v105
    %v207 = vunpack.c.h.b16 %v105
    %v208 = vunpack.c.l.b16 %v106
    %v209 = vunpack.c.h.b16 %v106
    %v210 = vunpack.c.l.b16 %v107
    %v211 = vunpack.c.h.b16 %v107
    %v212 = vunpack.c.l.b16 %v108
    %v213 = vunpack.c.h.b16 %v108
    %v214 = vunpack.c.l.b16 %v109
    %v215 = vunpack.c.h.b16 %v109
    %v216 = vunpack.c.l.b16 %v110
    %v217 = vunpack.c.h.b16 %v110
    %v218 = vunpack.c.l.b16 %v111
    %v219 = vunpack.c.h.b16 %v111
    %v220 = vunpack.c.l.b16 %v112
    %v221 = vunpack.c.h.b16 %v112
    %v222 = vunpack.c.l.b16 %v113
    %v223 = vunpack.c.h.b16 %v113
    %v224 = vunpack.c.l.b16 %v114
    %v225 = vunpack.c.h.b16 %v114
    %v226 = vunpack.c.l.b16 %v115
    %v227 = vunpack.c.h.b16 %v115
    %v228 = vunpack.c.l.b16 %v116
    %v229 = vunpack.c.h.b16 %v116
    %v230 = vunpack.c.l.b16 %v117
    %v231 = vunpack.c.h.b16 %v117
    %v232 = vunpack.c.l.b16 %v118
    %v233 = vunpack.c.h.b16 %v118
    %v234 = vunpack.c.l.b16 %v119
    %v235 = vunpack.c.h.b16 %v119
    %v236 = vunpack.c.l.b16 %v120
    %v237 = vunpack.c.h.b16 %v120
    %v238 = vunpack.c.l.b16 %v121
    %v239 = vunpack.c.h.b16 %v121
    %v240 = vunpack.c.l.b16 %v122
    %v241 = vunpack.c.h.b16 %v122
    %v242 = vunpack.c.l.b16 %v123
    %v243 = vunpack.c.h.b16 %v123
    %v244 = vunpack.c.l.b16 %v124
    %v245 = vunpack.c.h.b16 %v124
    %v246 = vunpack.c.l.b16 %v125
    %v247 = vunpack.c.h.b16 %v125
    %v248 = vunpack.c.l.b16 %v126
    %v249 = vunpack.c.h.b16 %v126
    %v250 = vunpack.c.l.b16 %v127
    %v251 = vunpack.c.h.b16 %v127
    %v252 = vpack.c.b16 %v192, %v188
    %v253 = vpack.c.b16 %v193, %v189
    %v254 = vpack.c.b16 %v194, %v190
    %v255 = vpack.c.b16 %v195, %v191
    %v256 = vpack.c.b16 %v200, %v196
    %v257 = vpack.c.b16 %v201, %v197
    %v258 = vpack.c.b16 %v202, %v198
    %v259 = vpack.c.b16 %v203, %v199
    %v260 = vpack.c.b16 %v208, %v204
    %v261 = vpack.c.b16 %v209, %v205
    %v262 = vpack.c.b16 %v210, %v206
    %v263 = vpack.c.b16 %v211, %v207
    %v264 = vpack.c.b16 %v216, %v212
    %v265 = vpack.c.b16 %v217, %v213
    %v266 = vpack.c.b16 %v218, %v214
    %v267 = vpack.c.b16 %v219, %v215
    %v268 = vpack.c.b16 %v224, %v220
    %v269 = vpack.c.b16 %v225, %v221
    %v270 = vpack.c.b16 %v226, %v222
    %v271 = vpack.c.b16 %v227, %v223
    %v272 = vpack.c.b16 %v232, %v228
    %v273 = vpack.c.b16 %v233, %v229
    %v274 = vpack.c.b16 %v234, %v230
    %v275 = vpack.c.b16 %v235, %v231
    %v276 = vpack.c.b16 %v240, %v236
    %v277 = vpack.c.b16 %v241, %v237
    %v278 = vpack.c.b16 %v242, %v238
    %v279 = vpack.c.b16 %v243, %v239
    %v280 = vpack.c.b16 %v248, %v244
    %v281 = vpack.c.b16 %v249, %v245
    %v282 = vpack.c.b16 %v250, %v246
    %v283 = vpack.c.b16 %v251, %v247
    %316 = vmatprep.subr.bf16.mxu0 %v281
    %317 = vmatpush1.bf16.msra.mxu0 %v280
    %318 = vmatprep.subr.bf16.mxu0 %v277
    %319 = vmatpush1.bf16.msra.mxu0 %v276
    %320 = vmatprep.subr.bf16.mxu0 %v273
    %321 = vmatpush1.bf16.msra.mxu0 %v272
    %322 = vmatprep.subr.bf16.mxu0 %v269
    %323 = vmatpush1.bf16.msra.mxu0 %v268
    %324 = vmatprep.subr.bf16.mxu0 %v265
    %325 = vmatpush1.bf16.msra.mxu0 %v264
    %326 = vmatprep.subr.bf16.mxu0 %v261
    %327 = vmatpush1.bf16.msra.mxu0 %v260
    %328 = vmatprep.subr.bf16.mxu0 %v257
    %329 = vmatpush1.bf16.msra.mxu0 %v256
    %330 = vmatprep.subr.bf16.mxu0 %v253
    %331 = vmatpush1.bf16.msra.mxu0 %v252
    %332 = vmatprep.subr.bf16.mxu0 0
    %333 = vmatpush2.bf16.msra.mxu0 0
    %334 = vmatprep.subr.bf16.mxu0 0
    %335 = vmatpush2.bf16.msra.mxu0 0
    %336 = vmatprep.subr.bf16.mxu0 0
    %337 = vmatpush2.bf16.msra.mxu0 0
    %338 = vmatprep.subr.bf16.mxu0 0
    %339 = vmatpush2.bf16.msra.mxu0 0
    %340 = vmatprep.subr.bf16.mxu0 0
    %341 = vmatpush2.bf16.msra.mxu0 0
    %342 = vmatprep.subr.bf16.mxu0 0
    %343 = vmatpush2.bf16.msra.mxu0 0
    %344 = vmatprep.subr.bf16.mxu0 0
    %345 = vmatpush2.bf16.msra.mxu0 0
    %346 = vmatprep.subr.bf16.mxu0 0
    %347 = vmatpush2.bf16.msra.mxu0 0
    %348 = vmatprep.mubr.bf16.mxu0 0
    %349 = vmatmul.mubr.bf16.gmra.mxu0 %v154
    %v350 = vpop.f32.mrf.mxu0
    %v351 = vadd.f32 %v133, %v350
    %v352 = vpop.f32.mrf.mxu0
    %v353 = vadd.f32 %v137, %v352
    %v354 = vpop.f32.mrf.mxu0
    %v355 = vadd.f32 %v133, %v354
    %v356 = vpop.f32.mrf.mxu0
    %v357 = vadd.f32 %v137, %v356
    %358 = vdwg.mxu0
    %359 = vmatprep.subr.bf16.mxu0 %v283
    %360 = vmatpush1.bf16.msra.mxu0 %v282
    %361 = vmatprep.subr.bf16.mxu0 %v279
    %362 = vmatpush1.bf16.msra.mxu0 %v278
    %363 = vmatprep.subr.bf16.mxu0 %v275
    %364 = vmatpush1.bf16.msra.mxu0 %v274
    %365 = vmatprep.subr.bf16.mxu0 %v271
    %366 = vmatpush1.bf16.msra.mxu0 %v270
    %367 = vmatprep.subr.bf16.mxu0 %v267
    %368 = vmatpush1.bf16.msra.mxu0 %v266
    %369 = vmatprep.subr.bf16.mxu0 %v263
    %370 = vmatpush1.bf16.msra.mxu0 %v262
    %371 = vmatprep.subr.bf16.mxu0 %v259
    %372 = vmatpush1.bf16.msra.mxu0 %v258
    %373 = vmatprep.subr.bf16.mxu0 %v255
    %374 = vmatpush1.bf16.msra.mxu0 %v254
    %375 = vmatprep.subr.bf16.mxu0 0
    %376 = vmatpush2.bf16.msra.mxu0 0
    %377 = vmatprep.subr.bf16.mxu0 0
    %378 = vmatpush2.bf16.msra.mxu0 0
    %379 = vmatprep.subr.bf16.mxu0 0
    %380 = vmatpush2.bf16.msra.mxu0 0
    %381 = vmatprep.subr.bf16.mxu0 0
    %382 = vmatpush2.bf16.msra.mxu0 0
    %383 = vmatprep.subr.bf16.mxu0 0
    %384 = vmatpush2.bf16.msra.mxu0 0
    %385 = vmatprep.subr.bf16.mxu0 0
    %386 = vmatpush2.bf16.msra.mxu0 0
    %387 = vmatprep.subr.bf16.mxu0 0
    %388 = vmatpush2.bf16.msra.mxu0 0
    %389 = vmatprep.subr.bf16.mxu0 0
    %390 = vmatpush2.bf16.msra.mxu0 0
    %391 = vmatprep.mubr.bf16.mxu0 0
    %392 = vmatmul.mubr.bf16.gmra.mxu0 %v154
    %v393 = vpop.f32.mrf.mxu0
    %v394 = vadd.f32 %v141, %v393
    %v395 = vpop.f32.mrf.mxu0
    %v396 = vadd.f32 %v145, %v395
    %v397 = vpop.f32.mrf.mxu0
    %v398 = vadd.f32 %v141, %v397
    %v399 = vpop.f32.mrf.mxu0
    %v400 = vadd.f32 %v145, %v399
    %401 = vdwg.mxu0
    %v402 = vsub.f32 0.0, %v351
    %v403 = vsub.f32 0.0, %v353
    %v404 = vsub.f32 0.0, %v394
    %v405 = vsub.f32 0.0, %v396
    %v406 = vsub.f32 0.0, %v355
    %v407 = vsub.f32 0.0, %v357
    %v408 = vsub.f32 0.0, %v398
    %v409 = vsub.f32 0.0, %v400
    %v410 = vmul.f32 %v402, 1.442695
    %v411 = vpow.pop %v410
    %v412 = vmul.f32 %v403, 1.442695
    %v413 = vpow.pop %v412
    %v414 = vmul.f32 %v404, 1.442695
    %v415 = vpow.pop %v414
    %v416 = vmul.f32 %v405, 1.442695
    %v417 = vpow.pop %v416
    %v418 = vmul.f32 %v406, 1.442695
    %v419 = vpow.pop %v418
    %v420 = vmul.f32 %v407, 1.442695
    %v421 = vpow.pop %v420
    %v422 = vmul.f32 %v408, 1.442695
    %v423 = vpow.pop %v422
    %v424 = vmul.f32 %v409, 1.442695
    %v425 = vpow.pop %v424
    %v426 = vadd.f32 %v411, 1.0
    %v427 = vadd.f32 %v413, 1.0
    %v428 = vadd.f32 %v415, 1.0
    %v429 = vadd.f32 %v417, 1.0
    %v430 = vadd.f32 %v419, 1.0
    %v431 = vadd.f32 %v421, 1.0
    %v432 = vadd.f32 %v423, 1.0
    %v433 = vadd.f32 %v425, 1.0
    %v434 = vrcp.pop %v426
    %v435 = vrcp.pop %v427
    %v436 = vrcp.pop %v428
    %v437 = vrcp.pop %v429
    %v438 = vrcp.pop %v430
    %v439 = vrcp.pop %v431
    %v440 = vrcp.pop %v432
    %v441 = vrcp.pop %v433
    %v442 = vmul.f32 %v351, %v434
    %v443 = vmul.f32 %v353, %v435
    %v444 = vmul.f32 %v394, %v436
    %v445 = vmul.f32 %v396, %v437
    %v446 = vmul.f32 %v355, %v438
    %v447 = vmul.f32 %v357, %v439
    %v448 = vmul.f32 %v398, %v440
    %v449 = vmul.f32 %v400, %v441
    %v450 = vpack.c.bf16 %v446, %v442
    %v451 = vpack.c.bf16 %v447, %v443
    %v452 = vpack.c.bf16 %v448, %v444
    %v453 = vpack.c.bf16 %v449, %v445
    %v454 = vld [vmem:[#allocation8] sm:$0xff]
    %v455 = vld [vmem:[#allocation8 + $0x8] sm:$0xff]
    %v456 = vld [vmem:[#allocation8 + $0x10] sm:$0xff]
    %v457 = vld [vmem:[#allocation8 + $0x18] sm:$0xff]
    %v458 = vld [vmem:[#allocation8 + $0x20] sm:$0xff]
    %v459 = vld [vmem:[#allocation8 + $0x28] sm:$0xff]
    %v460 = vld [vmem:[#allocation8 + $0x30] sm:$0xff]
    %v461 = vld [vmem:[#allocation8 + $0x38] sm:$0xff]
    %v462 = vld [vmem:[#allocation8 + $0x40] sm:$0xff]
    %v463 = vld [vmem:[#allocation8 + $0x48] sm:$0xff]
    %v464 = vld [vmem:[#allocation8 + $0x50] sm:$0xff]
    %v465 = vld [vmem:[#allocation8 + $0x58] sm:$0xff]
    %v466 = vld [vmem:[#allocation8 + $0x60] sm:$0xff]
    %v467 = vld [vmem:[#allocation8 + $0x68] sm:$0xff]
    %v468 = vld [vmem:[#allocation8 + $0x70] sm:$0xff]
    %v469 = vld [vmem:[#allocation8 + $0x78] sm:$0xff]
    %v470 = vld [vmem:[#allocation8 + $0x80] sm:$0xff]
    %v471 = vld [vmem:[#allocation8 + $0x88] sm:$0xff]
    %v472 = vld [vmem:[#allocation8 + $0x90] sm:$0xff]
    %v473 = vld [vmem:[#allocation8 + $0x98] sm:$0xff]
    %v474 = vld [vmem:[#allocation8 + $0xa0] sm:$0xff]
    %v475 = vld [vmem:[#allocation8 + $0xa8] sm:$0xff]
    %v476 = vld [vmem:[#allocation8 + $0xb0] sm:$0xff]
    %v477 = vld [vmem:[#allocation8 + $0xb8] sm:$0xff]
    %v478 = vld [vmem:[#allocation8 + $0xc0] sm:$0xff]
    %v479 = vld [vmem:[#allocation8 + $0xc8] sm:$0xff]
    %v480 = vld [vmem:[#allocation8 + $0xd0] sm:$0xff]
    %v481 = vld [vmem:[#allocation8 + $0xd8] sm:$0xff]
    %v482 = vld [vmem:[#allocation8 + $0xe0] sm:$0xff]
    %v483 = vld [vmem:[#allocation8 + $0xe8] sm:$0xff]
    %v484 = vld [vmem:[#allocation8 + $0xf0] sm:$0xff]
    %v485 = vld [vmem:[#allocation8 + $0xf8] sm:$0xff]
    %v486 = vld [vmem:[#allocation8 + $0x100] sm:$0xff]
    %v487 = vld [vmem:[#allocation8 + $0x108] sm:$0xff]
    %v488 = vld [vmem:[#allocation8 + $0x110] sm:$0xff]
    %v489 = vld [vmem:[#allocation8 + $0x118] sm:$0xff]
    %v490 = vld [vmem:[#allocation8 + $0x120] sm:$0xff]
    %v491 = vld [vmem:[#allocation8 + $0x128] sm:$0xff]
    %v492 = vld [vmem:[#allocation8 + $0x130] sm:$0xff]
    %v493 = vld [vmem:[#allocation8 + $0x138] sm:$0xff]
    %v494 = vld [vmem:[#allocation8 + $0x140] sm:$0xff]
    %v495 = vld [vmem:[#allocation8 + $0x148] sm:$0xff]
    %v496 = vld [vmem:[#allocation8 + $0x150] sm:$0xff]
    %v497 = vld [vmem:[#allocation8 + $0x158] sm:$0xff]
    %v498 = vld [vmem:[#allocation8 + $0x160] sm:$0xff]
    %v499 = vld [vmem:[#allocation8 + $0x168] sm:$0xff]
    %v500 = vld [vmem:[#allocation8 + $0x170] sm:$0xff]
    %v501 = vld [vmem:[#allocation8 + $0x178] sm:$0xff]
    %v502 = vld [vmem:[#allocation8 + $0x180] sm:$0xff]
    %v503 = vld [vmem:[#allocation8 + $0x188] sm:$0xff]
    %v504 = vld [vmem:[#allocation8 + $0x190] sm:$0xff]
    %v505 = vld [vmem:[#allocation8 + $0x198] sm:$0xff]
    %v506 = vld [vmem:[#allocation8 + $0x1a0] sm:$0xff]
    %v507 = vld [vmem:[#allocation8 + $0x1a8] sm:$0xff]
    %v508 = vld [vmem:[#allocation8 + $0x1b0] sm:$0xff]
    %v509 = vld [vmem:[#allocation8 + $0x1b8] sm:$0xff]
    %v510 = vld [vmem:[#allocation8 + $0x1c0] sm:$0xff]
    %v511 = vld [vmem:[#allocation8 + $0x1c8] sm:$0xff]
    %v512 = vld [vmem:[#allocation8 + $0x1d0] sm:$0xff]
    %v513 = vld [vmem:[#allocation8 + $0x1d8] sm:$0xff]
    %v514 = vld [vmem:[#allocation8 + $0x1e0] sm:$0xff]
    %v515 = vld [vmem:[#allocation8 + $0x1e8] sm:$0xff]
    %v516 = vld [vmem:[#allocation8 + $0x1f0] sm:$0xff]
    %v517 = vld [vmem:[#allocation8 + $0x1f8] sm:$0xff]
    %v518 = vld [vmem:[#allocation8 + $0x200] sm:$0xff]
    %v519 = vld [vmem:[#allocation8 + $0x208] sm:$0xff]
    %v520 = vld [vmem:[#allocation8 + $0x210] sm:$0xff]
    %v521 = vld [vmem:[#allocation8 + $0x218] sm:$0xff]
    %v522 = vld [vmem:[#allocation8 + $0x220] sm:$0xff]
    %v523 = vld [vmem:[#allocation8 + $0x228] sm:$0xff]
    %v524 = vld [vmem:[#allocation8 + $0x230] sm:$0xff]
    %v525 = vld [vmem:[#allocation8 + $0x238] sm:$0xff]
    %v526 = vld [vmem:[#allocation8 + $0x240] sm:$0xff]
    %v527 = vld [vmem:[#allocation8 + $0x248] sm:$0xff]
    %v528 = vld [vmem:[#allocation8 + $0x250] sm:$0xff]
    %v529 = vld [vmem:[#allocation8 + $0x258] sm:$0xff]
    %v530 = vld [vmem:[#allocation8 + $0x260] sm:$0xff]
    %v531 = vld [vmem:[#allocation8 + $0x268] sm:$0xff]
    %v532 = vld [vmem:[#allocation8 + $0x270] sm:$0xff]
    %v533 = vld [vmem:[#allocation8 + $0x278] sm:$0xff]
    %v534 = vld [vmem:[#allocation8 + $0x280] sm:$0xff]
    %v535 = vld [vmem:[#allocation8 + $0x288] sm:$0xff]
    %v536 = vld [vmem:[#allocation8 + $0x290] sm:$0xff]
    %v537 = vld [vmem:[#allocation8 + $0x298] sm:$0xff]
    %v538 = vld [vmem:[#allocation8 + $0x2a0] sm:$0xff]
    %v539 = vld [vmem:[#allocation8 + $0x2a8] sm:$0xff]
    %v540 = vld [vmem:[#allocation8 + $0x2b0] sm:$0xff]
    %v541 = vld [vmem:[#allocation8 + $0x2b8] sm:$0xff]
    %v542 = vld [vmem:[#allocation8 + $0x2c0] sm:$0xff]
    %v543 = vld [vmem:[#allocation8 + $0x2c8] sm:$0xff]
    %v544 = vld [vmem:[#allocation8 + $0x2d0] sm:$0xff]
    %v545 = vld [vmem:[#allocation8 + $0x2d8] sm:$0xff]
    %v546 = vld [vmem:[#allocation8 + $0x2e0] sm:$0xff]
    %v547 = vld [vmem:[#allocation8 + $0x2e8] sm:$0xff]
    %v548 = vld [vmem:[#allocation8 + $0x2f0] sm:$0xff]
    %v549 = vld [vmem:[#allocation8 + $0x2f8] sm:$0xff]
    %v550 = vld [vmem:[#allocation8 + $0x300] sm:$0xff]
    %v551 = vld [vmem:[#allocation8 + $0x308] sm:$0xff]
    %v552 = vld [vmem:[#allocation8 + $0x310] sm:$0xff]
    %v553 = vld [vmem:[#allocation8 + $0x318] sm:$0xff]
    %v554 = vld [vmem:[#allocation8 + $0x320] sm:$0xff]
    %v555 = vld [vmem:[#allocation8 + $0x328] sm:$0xff]
    %v556 = vld [vmem:[#allocation8 + $0x330] sm:$0xff]
    %v557 = vld [vmem:[#allocation8 + $0x338] sm:$0xff]
    %v558 = vld [vmem:[#allocation8 + $0x340] sm:$0xff]
    %v559 = vld [vmem:[#allocation8 + $0x348] sm:$0xff]
    %v560 = vld [vmem:[#allocation8 + $0x350] sm:$0xff]
    %v561 = vld [vmem:[#allocation8 + $0x358] sm:$0xff]
    %v562 = vld [vmem:[#allocation8 + $0x360] sm:$0xff]
    %v563 = vld [vmem:[#allocation8 + $0x368] sm:$0xff]
    %v564 = vld [vmem:[#allocation8 + $0x370] sm:$0xff]
    %v565 = vld [vmem:[#allocation8 + $0x378] sm:$0xff]
    %v566 = vld [vmem:[#allocation8 + $0x380] sm:$0xff]
    %v567 = vld [vmem:[#allocation8 + $0x388] sm:$0xff]
    %v568 = vld [vmem:[#allocation8 + $0x390] sm:$0xff]
    %v569 = vld [vmem:[#allocation8 + $0x398] sm:$0xff]
    %v570 = vld [vmem:[#allocation8 + $0x3a0] sm:$0xff]
    %v571 = vld [vmem:[#allocation8 + $0x3a8] sm:$0xff]
    %v572 = vld [vmem:[#allocation8 + $0x3b0] sm:$0xff]
    %v573 = vld [vmem:[#allocation8 + $0x3b8] sm:$0xff]
    %v574 = vld [vmem:[#allocation8 + $0x3c0] sm:$0xff]
    %v575 = vld [vmem:[#allocation8 + $0x3c8] sm:$0xff]
    %v576 = vld [vmem:[#allocation8 + $0x3d0] sm:$0xff]
    %v577 = vld [vmem:[#allocation8 + $0x3d8] sm:$0xff]
    %v578 = vld [vmem:[#allocation8 + $0x3e0] sm:$0xff]
    %v579 = vld [vmem:[#allocation8 + $0x3e8] sm:$0xff]
    %v580 = vld [vmem:[#allocation8 + $0x3f0] sm:$0xff]
    %v581 = vld [vmem:[#allocation8 + $0x3f8] sm:$0xff]
    %v582 = vld [vmem:[%s4] sm:$0xf]
    %v584 = vlaneseq
    %v585 = vshrl.u32 %v584, 7
    %v586 = vsub.s32 0, %v585
    %v587 = vrot.slane %v582, %v586
    %v588 = vlaneseq
    %v589 = vshrl.u32 %v588, 7
    %v590 = vsub.s32 1, %v589
    %v591 = vrot.slane %v582, %v590
    %v592 = vlaneseq
    %v593 = vshrl.u32 %v592, 7
    %v594 = vsub.s32 2, %v593
    %v595 = vrot.slane %v582, %v594
    %v596 = vlaneseq
    %v597 = vshrl.u32 %v596, 7
    %v598 = vsub.s32 3, %v597
    %v599 = vrot.slane %v582, %v598
    %v732 = vunpack.c.l.b16 %v454
    %v733 = vunpack.c.h.b16 %v454
    %v734 = vunpack.c.l.b16 %v455
    %v735 = vunpack.c.h.b16 %v455
    %v736 = vunpack.c.l.b16 %v456
    %v737 = vunpack.c.h.b16 %v456
    %v738 = vunpack.c.l.b16 %v457
    %v739 = vunpack.c.h.b16 %v457
    %v740 = vunpack.c.l.b16 %v458
    %v741 = vunpack.c.h.b16 %v458
    %v742 = vunpack.c.l.b16 %v459
    %v743 = vunpack.c.h.b16 %v459
    %v744 = vunpack.c.l.b16 %v460
    %v745 = vunpack.c.h.b16 %v460
    %v746 = vunpack.c.l.b16 %v461
    %v747 = vunpack.c.h.b16 %v461
    %v748 = vunpack.c.l.b16 %v462
    %v749 = vunpack.c.h.b16 %v462
    %v750 = vunpack.c.l.b16 %v463
    %v751 = vunpack.c.h.b16 %v463
    %v752 = vunpack.c.l.b16 %v464
    %v753 = vunpack.c.h.b16 %v464
    %v754 = vunpack.c.l.b16 %v465
    %v755 = vunpack.c.h.b16 %v465
    %v756 = vunpack.c.l.b16 %v466
    %v757 = vunpack.c.h.b16 %v466
    %v758 = vunpack.c.l.b16 %v467
    %v759 = vunpack.c.h.b16 %v467
    %v760 = vunpack.c.l.b16 %v468
    %v761 = vunpack.c.h.b16 %v468
    %v762 = vunpack.c.l.b16 %v469
    %v763 = vunpack.c.h.b16 %v469
    %v764 = vunpack.c.l.b16 %v470
    %v765 = vunpack.c.h.b16 %v470
    %v766 = vunpack.c.l.b16 %v471
    %v767 = vunpack.c.h.b16 %v471
    %v768 = vunpack.c.l.b16 %v472
    %v769 = vunpack.c.h.b16 %v472
    %v770 = vunpack.c.l.b16 %v473
    %v771 = vunpack.c.h.b16 %v473
    %v772 = vunpack.c.l.b16 %v474
    %v773 = vunpack.c.h.b16 %v474
    %v774 = vunpack.c.l.b16 %v475
    %v775 = vunpack.c.h.b16 %v475
    %v776 = vunpack.c.l.b16 %v476
    %v777 = vunpack.c.h.b16 %v476
    %v778 = vunpack.c.l.b16 %v477
    %v779 = vunpack.c.h.b16 %v477
    %v780 = vunpack.c.l.b16 %v478
    %v781 = vunpack.c.h.b16 %v478
    %v782 = vunpack.c.l.b16 %v479
    %v783 = vunpack.c.h.b16 %v479
    %v784 = vunpack.c.l.b16 %v480
    %v785 = vunpack.c.h.b16 %v480
    %v786 = vunpack.c.l.b16 %v481
    %v787 = vunpack.c.h.b16 %v481
    %v788 = vunpack.c.l.b16 %v482
    %v789 = vunpack.c.h.b16 %v482
    %v790 = vunpack.c.l.b16 %v483
    %v791 = vunpack.c.h.b16 %v483
    %v792 = vunpack.c.l.b16 %v484
    %v793 = vunpack.c.h.b16 %v484
    %v794 = vunpack.c.l.b16 %v485
    %v795 = vunpack.c.h.b16 %v485
    %v796 = vunpack.c.l.b16 %v486
    %v797 = vunpack.c.h.b16 %v486
    %v798 = vunpack.c.l.b16 %v487
    %v799 = vunpack.c.h.b16 %v487
    %v800 = vunpack.c.l.b16 %v488
    %v801 = vunpack.c.h.b16 %v488
    %v802 = vunpack.c.l.b16 %v489
    %v803 = vunpack.c.h.b16 %v489
    %v804 = vunpack.c.l.b16 %v490
    %v805 = vunpack.c.h.b16 %v490
    %v806 = vunpack.c.l.b16 %v491
    %v807 = vunpack.c.h.b16 %v491
    %v808 = vunpack.c.l.b16 %v492
    %v809 = vunpack.c.h.b16 %v492
    %v810 = vunpack.c.l.b16 %v493
    %v811 = vunpack.c.h.b16 %v493
    %v812 = vunpack.c.l.b16 %v494
    %v813 = vunpack.c.h.b16 %v494
    %v814 = vunpack.c.l.b16 %v495
    %v815 = vunpack.c.h.b16 %v495
    %v816 = vunpack.c.l.b16 %v496
    %v817 = vunpack.c.h.b16 %v496
    %v818 = vunpack.c.l.b16 %v497
    %v819 = vunpack.c.h.b16 %v497
    %v820 = vunpack.c.l.b16 %v498
    %v821 = vunpack.c.h.b16 %v498
    %v822 = vunpack.c.l.b16 %v499
    %v823 = vunpack.c.h.b16 %v499
    %v824 = vunpack.c.l.b16 %v500
    %v825 = vunpack.c.h.b16 %v500
    %v826 = vunpack.c.l.b16 %v501
    %v827 = vunpack.c.h.b16 %v501
    %v828 = vunpack.c.l.b16 %v502
    %v829 = vunpack.c.h.b16 %v502
    %v830 = vunpack.c.l.b16 %v503
    %v831 = vunpack.c.h.b16 %v503
    %v832 = vunpack.c.l.b16 %v504
    %v833 = vunpack.c.h.b16 %v504
    %v834 = vunpack.c.l.b16 %v505
    %v835 = vunpack.c.h.b16 %v505
    %v836 = vunpack.c.l.b16 %v506
    %v837 = vunpack.c.h.b16 %v506
    %v838 = vunpack.c.l.b16 %v507
    %v839 = vunpack.c.h.b16 %v507
    %v840 = vunpack.c.l.b16 %v508
    %v841 = vunpack.c.h.b16 %v508
    %v842 = vunpack.c.l.b16 %v509
    %v843 = vunpack.c.h.b16 %v509
    %v844 = vunpack.c.l.b16 %v510
    %v845 = vunpack.c.h.b16 %v510
    %v846 = vunpack.c.l.b16 %v511
    %v847 = vunpack.c.h.b16 %v511
    %v848 = vunpack.c.l.b16 %v512
    %v849 = vunpack.c.h.b16 %v512
    %v850 = vunpack.c.l.b16 %v513
    %v851 = vunpack.c.h.b16 %v513
    %v852 = vunpack.c.l.b16 %v514
    %v853 = vunpack.c.h.b16 %v514
    %v854 = vunpack.c.l.b16 %v515
    %v855 = vunpack.c.h.b16 %v515
    %v856 = vunpack.c.l.b16 %v516
    %v857 = vunpack.c.h.b16 %v516
    %v858 = vunpack.c.l.b16 %v517
    %v859 = vunpack.c.h.b16 %v517
    %v860 = vunpack.c.l.b16 %v518
    %v861 = vunpack.c.h.b16 %v518
    %v862 = vunpack.c.l.b16 %v519
    %v863 = vunpack.c.h.b16 %v519
    %v864 = vunpack.c.l.b16 %v520
    %v865 = vunpack.c.h.b16 %v520
    %v866 = vunpack.c.l.b16 %v521
    %v867 = vunpack.c.h.b16 %v521
    %v868 = vunpack.c.l.b16 %v522
    %v869 = vunpack.c.h.b16 %v522
    %v870 = vunpack.c.l.b16 %v523
    %v871 = vunpack.c.h.b16 %v523
    %v872 = vunpack.c.l.b16 %v524
    %v873 = vunpack.c.h.b16 %v524
    %v874 = vunpack.c.l.b16 %v525
    %v875 = vunpack.c.h.b16 %v525
    %v876 = vunpack.c.l.b16 %v526
    %v877 = vunpack.c.h.b16 %v526
    %v878 = vunpack.c.l.b16 %v527
    %v879 = vunpack.c.h.b16 %v527
    %v880 = vunpack.c.l.b16 %v528
    %v881 = vunpack.c.h.b16 %v528
    %v882 = vunpack.c.l.b16 %v529
    %v883 = vunpack.c.h.b16 %v529
    %v884 = vunpack.c.l.b16 %v530
    %v885 = vunpack.c.h.b16 %v530
    %v886 = vunpack.c.l.b16 %v531
    %v887 = vunpack.c.h.b16 %v531
    %v888 = vunpack.c.l.b16 %v532
    %v889 = vunpack.c.h.b16 %v532
    %v890 = vunpack.c.l.b16 %v533
    %v891 = vunpack.c.h.b16 %v533
    %v892 = vunpack.c.l.b16 %v534
    %v893 = vunpack.c.h.b16 %v534
    %v894 = vunpack.c.l.b16 %v535
    %v895 = vunpack.c.h.b16 %v535
    %v896 = vunpack.c.l.b16 %v536
    %v897 = vunpack.c.h.b16 %v536
    %v898 = vunpack.c.l.b16 %v537
    %v899 = vunpack.c.h.b16 %v537
    %v900 = vunpack.c.l.b16 %v538
    %v901 = vunpack.c.h.b16 %v538
    %v902 = vunpack.c.l.b16 %v539
    %v903 = vunpack.c.h.b16 %v539
    %v904 = vunpack.c.l.b16 %v540
    %v905 = vunpack.c.h.b16 %v540
    %v906 = vunpack.c.l.b16 %v541
    %v907 = vunpack.c.h.b16 %v541
    %v908 = vunpack.c.l.b16 %v542
    %v909 = vunpack.c.h.b16 %v542
    %v910 = vunpack.c.l.b16 %v543
    %v911 = vunpack.c.h.b16 %v543
    %v912 = vunpack.c.l.b16 %v544
    %v913 = vunpack.c.h.b16 %v544
    %v914 = vunpack.c.l.b16 %v545
    %v915 = vunpack.c.h.b16 %v545
    %v916 = vunpack.c.l.b16 %v546
    %v917 = vunpack.c.h.b16 %v546
    %v918 = vunpack.c.l.b16 %v547
    %v919 = vunpack.c.h.b16 %v547
    %v920 = vunpack.c.l.b16 %v548
    %v921 = vunpack.c.h.b16 %v548
    %v922 = vunpack.c.l.b16 %v549
    %v923 = vunpack.c.h.b16 %v549
    %v924 = vunpack.c.l.b16 %v550
    %v925 = vunpack.c.h.b16 %v550
    %v926 = vunpack.c.l.b16 %v551
    %v927 = vunpack.c.h.b16 %v551
    %v928 = vunpack.c.l.b16 %v552
    %v929 = vunpack.c.h.b16 %v552
    %v930 = vunpack.c.l.b16 %v553
    %v931 = vunpack.c.h.b16 %v553
    %v932 = vunpack.c.l.b16 %v554
    %v933 = vunpack.c.h.b16 %v554
    %v934 = vunpack.c.l.b16 %v555
    %v935 = vunpack.c.h.b16 %v555
    %v936 = vunpack.c.l.b16 %v556
    %v937 = vunpack.c.h.b16 %v556
    %v938 = vunpack.c.l.b16 %v557
    %v939 = vunpack.c.h.b16 %v557
    %v940 = vunpack.c.l.b16 %v558
    %v941 = vunpack.c.h.b16 %v558
    %v942 = vunpack.c.l.b16 %v559
    %v943 = vunpack.c.h.b16 %v559
    %v944 = vunpack.c.l.b16 %v560
    %v945 = vunpack.c.h.b16 %v560
    %v946 = vunpack.c.l.b16 %v561
    %v947 = vunpack.c.h.b16 %v561
    %v948 = vunpack.c.l.b16 %v562
    %v949 = vunpack.c.h.b16 %v562
    %v950 = vunpack.c.l.b16 %v563
    %v951 = vunpack.c.h.b16 %v563
    %v952 = vunpack.c.l.b16 %v564
    %v953 = vunpack.c.h.b16 %v564
    %v954 = vunpack.c.l.b16 %v565
    %v955 = vunpack.c.h.b16 %v565
    %v956 = vunpack.c.l.b16 %v566
    %v957 = vunpack.c.h.b16 %v566
    %v958 = vunpack.c.l.b16 %v567
    %v959 = vunpack.c.h.b16 %v567
    %v960 = vunpack.c.l.b16 %v568
    %v961 = vunpack.c.h.b16 %v568
    %v962 = vunpack.c.l.b16 %v569
    %v963 = vunpack.c.h.b16 %v569
    %v964 = vunpack.c.l.b16 %v570
    %v965 = vunpack.c.h.b16 %v570
    %v966 = vunpack.c.l.b16 %v571
    %v967 = vunpack.c.h.b16 %v571
    %v968 = vunpack.c.l.b16 %v572
    %v969 = vunpack.c.h.b16 %v572
    %v970 = vunpack.c.l.b16 %v573
    %v971 = vunpack.c.h.b16 %v573
    %v972 = vunpack.c.l.b16 %v574
    %v973 = vunpack.c.h.b16 %v574
    %v974 = vunpack.c.l.b16 %v575
    %v975 = vunpack.c.h.b16 %v575
    %v976 = vunpack.c.l.b16 %v576
    %v977 = vunpack.c.h.b16 %v576
    %v978 = vunpack.c.l.b16 %v577
    %v979 = vunpack.c.h.b16 %v577
    %v980 = vunpack.c.l.b16 %v578
    %v981 = vunpack.c.h.b16 %v578
    %v982 = vunpack.c.l.b16 %v579
    %v983 = vunpack.c.h.b16 %v579
    %v984 = vunpack.c.l.b16 %v580
    %v985 = vunpack.c.h.b16 %v580
    %v986 = vunpack.c.l.b16 %v581
    %v987 = vunpack.c.h.b16 %v581
    %v988 = vpack.c.b16 %v736, %v732
    %v989 = vpack.c.b16 %v737, %v733
    %v990 = vpack.c.b16 %v738, %v734
    %v991 = vpack.c.b16 %v739, %v735
    %v992 = vpack.c.b16 %v744, %v740
    %v993 = vpack.c.b16 %v745, %v741
    %v994 = vpack.c.b16 %v746, %v742
    %v995 = vpack.c.b16 %v747, %v743
    %v996 = vpack.c.b16 %v752, %v748
    %v997 = vpack.c.b16 %v753, %v749
    %v998 = vpack.c.b16 %v754, %v750
    %v999 = vpack.c.b16 %v755, %v751
    %v1000 = vpack.c.b16 %v760, %v756
    %v1001 = vpack.c.b16 %v761, %v757
    %v1002 = vpack.c.b16 %v762, %v758
    %v1003 = vpack.c.b16 %v763, %v759
    %v1004 = vpack.c.b16 %v768, %v764
    %v1005 = vpack.c.b16 %v769, %v765
    %v1006 = vpack.c.b16 %v770, %v766
    %v1007 = vpack.c.b16 %v771, %v767
    %v1008 = vpack.c.b16 %v776, %v772
    %v1009 = vpack.c.b16 %v777, %v773
    %v1010 = vpack.c.b16 %v778, %v774
    %v1011 = vpack.c.b16 %v779, %v775
    %v1012 = vpack.c.b16 %v784, %v780
    %v1013 = vpack.c.b16 %v785, %v781
    %v1014 = vpack.c.b16 %v786, %v782
    %v1015 = vpack.c.b16 %v787, %v783
    %v1016 = vpack.c.b16 %v792, %v788
    %v1017 = vpack.c.b16 %v793, %v789
    %v1018 = vpack.c.b16 %v794, %v790
    %v1019 = vpack.c.b16 %v795, %v791
    %v1020 = vpack.c.b16 %v800, %v796
    %v1021 = vpack.c.b16 %v801, %v797
    %v1022 = vpack.c.b16 %v802, %v798
    %v1023 = vpack.c.b16 %v803, %v799
    %v1024 = vpack.c.b16 %v808, %v804
    %v1025 = vpack.c.b16 %v809, %v805
    %v1026 = vpack.c.b16 %v810, %v806
    %v1027 = vpack.c.b16 %v811, %v807
    %v1028 = vpack.c.b16 %v816, %v812
    %v1029 = vpack.c.b16 %v817, %v813
    %v1030 = vpack.c.b16 %v818, %v814
    %v1031 = vpack.c.b16 %v819, %v815
    %v1032 = vpack.c.b16 %v824, %v820
    %v1033 = vpack.c.b16 %v825, %v821
    %v1034 = vpack.c.b16 %v826, %v822
    %v1035 = vpack.c.b16 %v827, %v823
    %v1036 = vpack.c.b16 %v832, %v828
    %v1037 = vpack.c.b16 %v833, %v829
    %v1038 = vpack.c.b16 %v834, %v830
    %v1039 = vpack.c.b16 %v835, %v831
    %v1040 = vpack.c.b16 %v840, %v836
    %v1041 = vpack.c.b16 %v841, %v837
    %v1042 = vpack.c.b16 %v842, %v838
    %v1043 = vpack.c.b16 %v843, %v839
    %v1044 = vpack.c.b16 %v848, %v844
    %v1045 = vpack.c.b16 %v849, %v845
    %v1046 = vpack.c.b16 %v850, %v846
    %v1047 = vpack.c.b16 %v851, %v847
    %v1048 = vpack.c.b16 %v856, %v852
    %v1049 = vpack.c.b16 %v857, %v853
    %v1050 = vpack.c.b16 %v858, %v854
    %v1051 = vpack.c.b16 %v859, %v855
    %v1052 = vpack.c.b16 %v864, %v860
    %v1053 = vpack.c.b16 %v865, %v861
    %v1054 = vpack.c.b16 %v866, %v862
    %v1055 = vpack.c.b16 %v867, %v863
    %v1056 = vpack.c.b16 %v872, %v868
    %v1057 = vpack.c.b16 %v873, %v869
    %v1058 = vpack.c.b16 %v874, %v870
    %v1059 = vpack.c.b16 %v875, %v871
    %v1060 = vpack.c.b16 %v880, %v876
    %v1061 = vpack.c.b16 %v881, %v877
    %v1062 = vpack.c.b16 %v882, %v878
    %v1063 = vpack.c.b16 %v883, %v879
    %v1064 = vpack.c.b16 %v888, %v884
    %v1065 = vpack.c.b16 %v889, %v885
    %v1066 = vpack.c.b16 %v890, %v886
    %v1067 = vpack.c.b16 %v891, %v887
    %v1068 = vpack.c.b16 %v896, %v892
    %v1069 = vpack.c.b16 %v897, %v893
    %v1070 = vpack.c.b16 %v898, %v894
    %v1071 = vpack.c.b16 %v899, %v895
    %v1072 = vpack.c.b16 %v904, %v900
    %v1073 = vpack.c.b16 %v905, %v901
    %v1074 = vpack.c.b16 %v906, %v902
    %v1075 = vpack.c.b16 %v907, %v903
    %v1076 = vpack.c.b16 %v912, %v908
    %v1077 = vpack.c.b16 %v913, %v909
    %v1078 = vpack.c.b16 %v914, %v910
    %v1079 = vpack.c.b16 %v915, %v911
    %v1080 = vpack.c.b16 %v920, %v916
    %v1081 = vpack.c.b16 %v921, %v917
    %v1082 = vpack.c.b16 %v922, %v918
    %v1083 = vpack.c.b16 %v923, %v919
    %v1084 = vpack.c.b16 %v928, %v924
    %v1085 = vpack.c.b16 %v929, %v925
    %v1086 = vpack.c.b16 %v930, %v926
    %v1087 = vpack.c.b16 %v931, %v927
    %v1088 = vpack.c.b16 %v936, %v932
    %v1089 = vpack.c.b16 %v937, %v933
    %v1090 = vpack.c.b16 %v938, %v934
    %v1091 = vpack.c.b16 %v939, %v935
    %v1092 = vpack.c.b16 %v944, %v940
    %v1093 = vpack.c.b16 %v945, %v941
    %v1094 = vpack.c.b16 %v946, %v942
    %v1095 = vpack.c.b16 %v947, %v943
    %v1096 = vpack.c.b16 %v952, %v948
    %v1097 = vpack.c.b16 %v953, %v949
    %v1098 = vpack.c.b16 %v954, %v950
    %v1099 = vpack.c.b16 %v955, %v951
    %v1100 = vpack.c.b16 %v960, %v956
    %v1101 = vpack.c.b16 %v961, %v957
    %v1102 = vpack.c.b16 %v962, %v958
    %v1103 = vpack.c.b16 %v963, %v959
    %v1104 = vpack.c.b16 %v968, %v964
    %v1105 = vpack.c.b16 %v969, %v965
    %v1106 = vpack.c.b16 %v970, %v966
    %v1107 = vpack.c.b16 %v971, %v967
    %v1108 = vpack.c.b16 %v976, %v972
    %v1109 = vpack.c.b16 %v977, %v973
    %v1110 = vpack.c.b16 %v978, %v974
    %v1111 = vpack.c.b16 %v979, %v975
    %v1112 = vpack.c.b16 %v984, %v980
    %v1113 = vpack.c.b16 %v985, %v981
    %v1114 = vpack.c.b16 %v986, %v982
    %v1115 = vpack.c.b16 %v987, %v983
    %1244 = vmatprep.subr.bf16.mxu0 %v1017
    %1245 = vmatpush1.bf16.msra.mxu0 %v1016
    %1246 = vmatprep.subr.bf16.mxu0 %v1013
    %1247 = vmatpush1.bf16.msra.mxu0 %v1012
    %1248 = vmatprep.subr.bf16.mxu0 %v1009
    %1249 = vmatpush1.bf16.msra.mxu0 %v1008
    %1250 = vmatprep.subr.bf16.mxu0 %v1005
    %1251 = vmatpush1.bf16.msra.mxu0 %v1004
    %1252 = vmatprep.subr.bf16.mxu0 %v1001
    %1253 = vmatpush1.bf16.msra.mxu0 %v1000
    %1254 = vmatprep.subr.bf16.mxu0 %v997
    %1255 = vmatpush1.bf16.msra.mxu0 %v996
    %1256 = vmatprep.subr.bf16.mxu0 %v993
    %1257 = vmatpush1.bf16.msra.mxu0 %v992
    %1258 = vmatprep.subr.bf16.mxu0 %v989
    %1259 = vmatpush1.bf16.msra.mxu0 %v988
    %1260 = vmatprep.subr.bf16.mxu0 %v1049
    %1261 = vmatpush2.bf16.msra.mxu0 %v1048
    %1262 = vmatprep.subr.bf16.mxu0 %v1045
    %1263 = vmatpush2.bf16.msra.mxu0 %v1044
    %1264 = vmatprep.subr.bf16.mxu0 %v1041
    %1265 = vmatpush2.bf16.msra.mxu0 %v1040
    %1266 = vmatprep.subr.bf16.mxu0 %v1037
    %1267 = vmatpush2.bf16.msra.mxu0 %v1036
    %1268 = vmatprep.subr.bf16.mxu0 %v1033
    %1269 = vmatpush2.bf16.msra.mxu0 %v1032
    %1270 = vmatprep.subr.bf16.mxu0 %v1029
    %1271 = vmatpush2.bf16.msra.mxu0 %v1028
    %1272 = vmatprep.subr.bf16.mxu0 %v1025
    %1273 = vmatpush2.bf16.msra.mxu0 %v1024
    %1274 = vmatprep.subr.bf16.mxu0 %v1021
    %1275 = vmatpush2.bf16.msra.mxu0 %v1020
    %1276 = vmatprep.mubr.bf16.mxu0 %v451
    %1277 = vmatmul.mubr.bf16.gmra.mxu0 %v450
    %v1278 = vpop.f32.mrf.mxu0
    %v1279 = vadd.f32 %v587, %v1278
    %v1280 = vpop.f32.mrf.mxu0
    %v1281 = vadd.f32 %v591, %v1280
    %v1282 = vpop.f32.mrf.mxu0
    %v1283 = vadd.f32 %v587, %v1282
    %v1284 = vpop.f32.mrf.mxu0
    %v1285 = vadd.f32 %v591, %v1284
    %1286 = vdwg.mxu0
    %1287 = vmatprep.subr.bf16.mxu0 %v1081
    %1288 = vmatpush1.bf16.msra.mxu0 %v1080
    %1289 = vmatprep.subr.bf16.mxu0 %v1077
    %1290 = vmatpush1.bf16.msra.mxu0 %v1076
    %1291 = vmatprep.subr.bf16.mxu0 %v1073
    %1292 = vmatpush1.bf16.msra.mxu0 %v1072
    %1293 = vmatprep.subr.bf16.mxu0 %v1069
    %1294 = vmatpush1.bf16.msra.mxu0 %v1068
    %1295 = vmatprep.subr.bf16.mxu0 %v1065
    %1296 = vmatpush1.bf16.msra.mxu0 %v1064
    %1297 = vmatprep.subr.bf16.mxu0 %v1061
    %1298 = vmatpush1.bf16.msra.mxu0 %v1060
    %1299 = vmatprep.subr.bf16.mxu0 %v1057
    %1300 = vmatpush1.bf16.msra.mxu0 %v1056
    %1301 = vmatprep.subr.bf16.mxu0 %v1053
    %1302 = vmatpush1.bf16.msra.mxu0 %v1052
    %1303 = vmatprep.subr.bf16.mxu0 %v1113
    %1304 = vmatpush2.bf16.msra.mxu0 %v1112
    %1305 = vmatprep.subr.bf16.mxu0 %v1109
    %1306 = vmatpush2.bf16.msra.mxu0 %v1108
    %1307 = vmatprep.subr.bf16.mxu0 %v1105
    %1308 = vmatpush2.bf16.msra.mxu0 %v1104
    %1309 = vmatprep.subr.bf16.mxu0 %v1101
    %1310 = vmatpush2.bf16.msra.mxu0 %v1100
    %1311 = vmatprep.subr.bf16.mxu0 %v1097
    %1312 = vmatpush2.bf16.msra.mxu0 %v1096
    %1313 = vmatprep.subr.bf16.mxu0 %v1093
    %1314 = vmatpush2.bf16.msra.mxu0 %v1092
    %1315 = vmatprep.subr.bf16.mxu0 %v1089
    %1316 = vmatpush2.bf16.msra.mxu0 %v1088
    %1317 = vmatprep.subr.bf16.mxu0 %v1085
    %1318 = vmatpush2.bf16.msra.mxu0 %v1084
    %1319 = vmatprep.mubr.bf16.mxu0 %v453
    %1320 = vmatmul.mubr.bf16.gmra.mxu0 %v452
    %v1321 = vpop.f32.mrf.mxu0
    %v1322 = vadd.f32 %v1279, %v1321
    %v1323 = vpop.f32.mrf.mxu0
    %v1324 = vadd.f32 %v1281, %v1323
    %v1325 = vpop.f32.mrf.mxu0
    %v1326 = vadd.f32 %v1283, %v1325
    %v1327 = vpop.f32.mrf.mxu0
    %v1328 = vadd.f32 %v1285, %v1327
    %1329 = vdwg.mxu0
    %1330 = vmatprep.subr.bf16.mxu0 %v1019
    %1331 = vmatpush1.bf16.msra.mxu0 %v1018
    %1332 = vmatprep.subr.bf16.mxu0 %v1015
    %1333 = vmatpush1.bf16.msra.mxu0 %v1014
    %1334 = vmatprep.subr.bf16.mxu0 %v1011
    %1335 = vmatpush1.bf16.msra.mxu0 %v1010
    %1336 = vmatprep.subr.bf16.mxu0 %v1007
    %1337 = vmatpush1.bf16.msra.mxu0 %v1006
    %1338 = vmatprep.subr.bf16.mxu0 %v1003
    %1339 = vmatpush1.bf16.msra.mxu0 %v1002
    %1340 = vmatprep.subr.bf16.mxu0 %v999
    %1341 = vmatpush1.bf16.msra.mxu0 %v998
    %1342 = vmatprep.subr.bf16.mxu0 %v995
    %1343 = vmatpush1.bf16.msra.mxu0 %v994
    %1344 = vmatprep.subr.bf16.mxu0 %v991
    %1345 = vmatpush1.bf16.msra.mxu0 %v990
    %1346 = vmatprep.subr.bf16.mxu0 %v1051
    %1347 = vmatpush2.bf16.msra.mxu0 %v1050
    %1348 = vmatprep.subr.bf16.mxu0 %v1047
    %1349 = vmatpush2.bf16.msra.mxu0 %v1046
    %1350 = vmatprep.subr.bf16.mxu0 %v1043
    %1351 = vmatpush2.bf16.msra.mxu0 %v1042
    %1352 = vmatprep.subr.bf16.mxu0 %v1039
    %1353 = vmatpush2.bf16.msra.mxu0 %v1038
    %1354 = vmatprep.subr.bf16.mxu0 %v1035
    %1355 = vmatpush2.bf16.msra.mxu0 %v1034
    %1356 = vmatprep.subr.bf16.mxu0 %v1031
    %1357 = vmatpush2.bf16.msra.mxu0 %v1030
    %1358 = vmatprep.subr.bf16.mxu0 %v1027
    %1359 = vmatpush2.bf16.msra.mxu0 %v1026
    %1360 = vmatprep.subr.bf16.mxu0 %v1023
    %1361 = vmatpush2.bf16.msra.mxu0 %v1022
    %1362 = vmatprep.mubr.bf16.mxu0 %v451
    %1363 = vmatmul.mubr.bf16.gmra.mxu0 %v450
    %v1364 = vpop.f32.mrf.mxu0
    %v1365 = vadd.f32 %v595, %v1364
    %v1366 = vpop.f32.mrf.mxu0
    %v1367 = vadd.f32 %v599, %v1366
    %v1368 = vpop.f32.mrf.mxu0
    %v1369 = vadd.f32 %v595, %v1368
    %v1370 = vpop.f32.mrf.mxu0
    %v1371 = vadd.f32 %v599, %v1370
    %1372 = vdwg.mxu0
    %1373 = vmatprep.subr.bf16.mxu0 %v1083
    %1374 = vmatpush1.bf16.msra.mxu0 %v1082
    %1375 = vmatprep.subr.bf16.mxu0 %v1079
    %1376 = vmatpush1.bf16.msra.mxu0 %v1078
    %1377 = vmatprep.subr.bf16.mxu0 %v1075
    %1378 = vmatpush1.bf16.msra.mxu0 %v1074
    %1379 = vmatprep.subr.bf16.mxu0 %v1071
    %1380 = vmatpush1.bf16.msra.mxu0 %v1070
    %1381 = vmatprep.subr.bf16.mxu0 %v1067
    %1382 = vmatpush1.bf16.msra.mxu0 %v1066
    %1383 = vmatprep.subr.bf16.mxu0 %v1063
    %1384 = vmatpush1.bf16.msra.mxu0 %v1062
    %1385 = vmatprep.subr.bf16.mxu0 %v1059
    %1386 = vmatpush1.bf16.msra.mxu0 %v1058
    %1387 = vmatprep.subr.bf16.mxu0 %v1055
    %1388 = vmatpush1.bf16.msra.mxu0 %v1054
    %1389 = vmatprep.subr.bf16.mxu0 %v1115
    %1390 = vmatpush2.bf16.msra.mxu0 %v1114
    %1391 = vmatprep.subr.bf16.mxu0 %v1111
    %1392 = vmatpush2.bf16.msra.mxu0 %v1110
    %1393 = vmatprep.subr.bf16.mxu0 %v1107
    %1394 = vmatpush2.bf16.msra.mxu0 %v1106
    %1395 = vmatprep.subr.bf16.mxu0 %v1103
    %1396 = vmatpush2.bf16.msra.mxu0 %v1102
    %1397 = vmatprep.subr.bf16.mxu0 %v1099
    %1398 = vmatpush2.bf16.msra.mxu0 %v1098
    %1399 = vmatprep.subr.bf16.mxu0 %v1095
    %1400 = vmatpush2.bf16.msra.mxu0 %v1094
    %1401 = vmatprep.subr.bf16.mxu0 %v1091
    %1402 = vmatpush2.bf16.msra.mxu0 %v1090
    %1403 = vmatprep.subr.bf16.mxu0 %v1087
    %1404 = vmatpush2.bf16.msra.mxu0 %v1086
    %1405 = vmatprep.mubr.bf16.mxu0 %v453
    %1406 = vmatmul.mubr.bf16.gmra.mxu0 %v452
    %v1407 = vpop.f32.mrf.mxu0
    %v1408 = vadd.f32 %v1365, %v1407
    %v1409 = vpop.f32.mrf.mxu0
    %v1410 = vadd.f32 %v1367, %v1409
    %v1411 = vpop.f32.mrf.mxu0
    %v1412 = vadd.f32 %v1369, %v1411
    %v1413 = vpop.f32.mrf.mxu0
    %v1414 = vadd.f32 %v1371, %v1413
    %1415 = vdwg.mxu0
    %v1416 = vsub.f32 0.0, %v1322
    %v1417 = vsub.f32 0.0, %v1324
    %v1418 = vsub.f32 0.0, %v1408
    %v1419 = vsub.f32 0.0, %v1410
    %v1420 = vsub.f32 0.0, %v1326
    %v1421 = vsub.f32 0.0, %v1328
    %v1422 = vsub.f32 0.0, %v1412
    %v1423 = vsub.f32 0.0, %v1414
    %v1424 = vmul.f32 %v1416, 1.442695
    %v1425 = vpow.pop %v1424
    %v1426 = vmul.f32 %v1417, 1.442695
    %v1427 = vpow.pop %v1426
    %v1428 = vmul.f32 %v1418, 1.442695
    %v1429 = vpow.pop %v1428
    %v1430 = vmul.f32 %v1419, 1.442695
    %v1431 = vpow.pop %v1430
    %v1432 = vmul.f32 %v1420, 1.442695
    %v1433 = vpow.pop %v1432
    %v1434 = vmul.f32 %v1421, 1.442695
    %v1435 = vpow.pop %v1434
    %v1436 = vmul.f32 %v1422, 1.442695
    %v1437 = vpow.pop %v1436
    %v1438 = vmul.f32 %v1423, 1.442695
    %v1439 = vpow.pop %v1438
    %v1440 = vadd.f32 %v1425, 1.0
    %v1441 = vadd.f32 %v1427, 1.0
    %v1442 = vadd.f32 %v1429, 1.0
    %v1443 = vadd.f32 %v1431, 1.0
    %v1444 = vadd.f32 %v1433, 1.0
    %v1445 = vadd.f32 %v1435, 1.0
    %v1446 = vadd.f32 %v1437, 1.0
    %v1447 = vadd.f32 %v1439, 1.0
    %v1448 = vrcp.pop %v1440
    %v1449 = vrcp.pop %v1441
    %v1450 = vrcp.pop %v1442
    %v1451 = vrcp.pop %v1443
    %v1452 = vrcp.pop %v1444
    %v1453 = vrcp.pop %v1445
    %v1454 = vrcp.pop %v1446
    %v1455 = vrcp.pop %v1447
    %v1456 = vmul.f32 %v1322, %v1448
    %v1457 = vmul.f32 %v1324, %v1449
    %v1458 = vmul.f32 %v1408, %v1450
    %v1459 = vmul.f32 %v1410, %v1451
    %v1460 = vmul.f32 %v1326, %v1452
    %v1461 = vmul.f32 %v1328, %v1453
    %v1462 = vmul.f32 %v1412, %v1454
    %v1463 = vmul.f32 %v1414, %v1455
    %v1464 = vpack.c.bf16 %v1460, %v1456
    %v1465 = vpack.c.bf16 %v1461, %v1457
    %v1466 = vpack.c.bf16 %v1462, %v1458
    %v1467 = vpack.c.bf16 %v1463, %v1459
    %v1468 = vld [vmem:[#allocation10] sm:$0xf]
    %v1469 = vld [vmem:[#allocation10 + $0x4] sm:$0xf]
    %v1470 = vld [vmem:[#allocation10 + $0x8] sm:$0xf]
    %v1471 = vld [vmem:[#allocation10 + $0xc] sm:$0xf]
    %v1472 = vld [vmem:[#allocation10 + $0x10] sm:$0xf]
    %v1473 = vld [vmem:[#allocation10 + $0x14] sm:$0xf]
    %v1474 = vld [vmem:[#allocation10 + $0x18] sm:$0xf]
    %v1475 = vld [vmem:[#allocation10 + $0x1c] sm:$0xf]
    %v1476 = vld [vmem:[#allocation10 + $0x20] sm:$0xf]
    %v1477 = vld [vmem:[#allocation10 + $0x24] sm:$0xf]
    %v1478 = vld [vmem:[#allocation10 + $0x28] sm:$0xf]
    %v1479 = vld [vmem:[#allocation10 + $0x2c] sm:$0xf]
    %v1480 = vld [vmem:[#allocation10 + $0x30] sm:$0xf]
    %v1481 = vld [vmem:[#allocation10 + $0x34] sm:$0xf]
    %v1482 = vld [vmem:[#allocation10 + $0x38] sm:$0xf]
    %v1483 = vld [vmem:[#allocation10 + $0x3c] sm:$0xf]
    %v1484 = vld [vmem:[#allocation10 + $0x40] sm:$0xf]
    %v1485 = vld [vmem:[#allocation10 + $0x44] sm:$0xf]
    %v1486 = vld [vmem:[#allocation10 + $0x48] sm:$0xf]
    %v1487 = vld [vmem:[#allocation10 + $0x4c] sm:$0xf]
    %v1488 = vld [vmem:[#allocation10 + $0x50] sm:$0xf]
    %v1489 = vld [vmem:[#allocation10 + $0x54] sm:$0xf]
    %v1490 = vld [vmem:[#allocation10 + $0x58] sm:$0xf]
    %v1491 = vld [vmem:[#allocation10 + $0x5c] sm:$0xf]
    %v1492 = vld [vmem:[#allocation10 + $0x60] sm:$0xf]
    %v1493 = vld [vmem:[#allocation10 + $0x64] sm:$0xf]
    %v1494 = vld [vmem:[#allocation10 + $0x68] sm:$0xf]
    %v1495 = vld [vmem:[#allocation10 + $0x6c] sm:$0xf]
    %v1496 = vld [vmem:[#allocation10 + $0x70] sm:$0xf]
    %v1497 = vld [vmem:[#allocation10 + $0x74] sm:$0xf]
    %v1498 = vld [vmem:[#allocation10 + $0x78] sm:$0xf]
    %v1499 = vld [vmem:[#allocation10 + $0x7c] sm:$0xf]
    %v1500 = vld [vmem:[#allocation10 + $0x80] sm:$0xf]
    %v1501 = vld [vmem:[#allocation10 + $0x84] sm:$0xf]
    %v1502 = vld [vmem:[#allocation10 + $0x88] sm:$0xf]
    %v1503 = vld [vmem:[#allocation10 + $0x8c] sm:$0xf]
    %v1504 = vld [vmem:[#allocation10 + $0x90] sm:$0xf]
    %v1505 = vld [vmem:[#allocation10 + $0x94] sm:$0xf]
    %v1506 = vld [vmem:[#allocation10 + $0x98] sm:$0xf]
    %v1507 = vld [vmem:[#allocation10 + $0x9c] sm:$0xf]
    %v1508 = vld [vmem:[#allocation10 + $0xa0] sm:$0xf]
    %v1509 = vld [vmem:[#allocation10 + $0xa4] sm:$0xf]
    %v1510 = vld [vmem:[#allocation10 + $0xa8] sm:$0xf]
    %v1511 = vld [vmem:[#allocation10 + $0xac] sm:$0xf]
    %v1512 = vld [vmem:[#allocation10 + $0xb0] sm:$0xf]
    %v1513 = vld [vmem:[#allocation10 + $0xb4] sm:$0xf]
    %v1514 = vld [vmem:[#allocation10 + $0xb8] sm:$0xf]
    %v1515 = vld [vmem:[#allocation10 + $0xbc] sm:$0xf]
    %v1516 = vld [vmem:[#allocation10 + $0xc0] sm:$0xf]
    %v1517 = vld [vmem:[#allocation10 + $0xc4] sm:$0xf]
    %v1518 = vld [vmem:[#allocation10 + $0xc8] sm:$0xf]
    %v1519 = vld [vmem:[#allocation10 + $0xcc] sm:$0xf]
    %v1520 = vld [vmem:[#allocation10 + $0xd0] sm:$0xf]
    %v1521 = vld [vmem:[#allocation10 + $0xd4] sm:$0xf]
    %v1522 = vld [vmem:[#allocation10 + $0xd8] sm:$0xf]
    %v1523 = vld [vmem:[#allocation10 + $0xdc] sm:$0xf]
    %v1524 = vld [vmem:[#allocation10 + $0xe0] sm:$0xf]
    %v1525 = vld [vmem:[#allocation10 + $0xe4] sm:$0xf]
    %v1526 = vld [vmem:[#allocation10 + $0xe8] sm:$0xf]
    %v1527 = vld [vmem:[#allocation10 + $0xec] sm:$0xf]
    %v1528 = vld [vmem:[#allocation10 + $0xf0] sm:$0xf]
    %v1529 = vld [vmem:[#allocation10 + $0xf4] sm:$0xf]
    %v1530 = vld [vmem:[#allocation10 + $0xf8] sm:$0xf]
    %v1531 = vld [vmem:[#allocation10 + $0xfc] sm:$0xf]
    %v1532 = vld [vmem:[%s6] sm:$0x1]
    %v1534 = vlaneseq
    %v1535 = vshrl.u32 %v1534, 7
    %v1536 = vsub.s32 0, %v1535
    %v1537 = vrot.slane %v1532, %v1536
    %v1603 = vunpack.c.l.b16 %v1468
    %v1604 = vunpack.c.l.b16 %v1469
    %v1605 = vunpack.c.l.b16 %v1470
    %v1606 = vunpack.c.l.b16 %v1471
    %v1607 = vunpack.c.l.b16 %v1472
    %v1608 = vunpack.c.l.b16 %v1473
    %v1609 = vunpack.c.l.b16 %v1474
    %v1610 = vunpack.c.l.b16 %v1475
    %v1611 = vunpack.c.l.b16 %v1476
    %v1612 = vunpack.c.l.b16 %v1477
    %v1613 = vunpack.c.l.b16 %v1478
    %v1614 = vunpack.c.l.b16 %v1479
    %v1615 = vunpack.c.l.b16 %v1480
    %v1616 = vunpack.c.l.b16 %v1481
    %v1617 = vunpack.c.l.b16 %v1482
    %v1618 = vunpack.c.l.b16 %v1483
    %v1619 = vunpack.c.l.b16 %v1484
    %v1620 = vunpack.c.l.b16 %v1485
    %v1621 = vunpack.c.l.b16 %v1486
    %v1622 = vunpack.c.l.b16 %v1487
    %v1623 = vunpack.c.l.b16 %v1488
    %v1624 = vunpack.c.l.b16 %v1489
    %v1625 = vunpack.c.l.b16 %v1490
    %v1626 = vunpack.c.l.b16 %v1491
    %v1627 = vunpack.c.l.b16 %v1492
    %v1628 = vunpack.c.l.b16 %v1493
    %v1629 = vunpack.c.l.b16 %v1494
    %v1630 = vunpack.c.l.b16 %v1495
    %v1631 = vunpack.c.l.b16 %v1496
    %v1632 = vunpack.c.l.b16 %v1497
    %v1633 = vunpack.c.l.b16 %v1498
    %v1634 = vunpack.c.l.b16 %v1499
    %v1635 = vunpack.c.l.b16 %v1500
    %v1636 = vunpack.c.l.b16 %v1501
    %v1637 = vunpack.c.l.b16 %v1502
    %v1638 = vunpack.c.l.b16 %v1503
    %v1639 = vunpack.c.l.b16 %v1504
    %v1640 = vunpack.c.l.b16 %v1505
    %v1641 = vunpack.c.l.b16 %v1506
    %v1642 = vunpack.c.l.b16 %v1507
    %v1643 = vunpack.c.l.b16 %v1508
    %v1644 = vunpack.c.l.b16 %v1509
    %v1645 = vunpack.c.l.b16 %v1510
    %v1646 = vunpack.c.l.b16 %v1511
    %v1647 = vunpack.c.l.b16 %v1512
    %v1648 = vunpack.c.l.b16 %v1513
    %v1649 = vunpack.c.l.b16 %v1514
    %v1650 = vunpack.c.l.b16 %v1515
    %v1651 = vunpack.c.l.b16 %v1516
    %v1652 = vunpack.c.l.b16 %v1517
    %v1653 = vunpack.c.l.b16 %v1518
    %v1654 = vunpack.c.l.b16 %v1519
    %v1655 = vunpack.c.l.b16 %v1520
    %v1656 = vunpack.c.l.b16 %v1521
    %v1657 = vunpack.c.l.b16 %v1522
    %v1658 = vunpack.c.l.b16 %v1523
    %v1659 = vunpack.c.l.b16 %v1524
    %v1660 = vunpack.c.l.b16 %v1525
    %v1661 = vunpack.c.l.b16 %v1526
    %v1662 = vunpack.c.l.b16 %v1527
    %v1663 = vunpack.c.l.b16 %v1528
    %v1664 = vunpack.c.l.b16 %v1529
    %v1665 = vunpack.c.l.b16 %v1530
    %v1666 = vunpack.c.l.b16 %v1531
    %v1667 = vpack.c.b16 %v1604, %v1603
    %v1668 = vpack.c.b16 %v1606, %v1605
    %v1669 = vpack.c.b16 %v1608, %v1607
    %v1670 = vpack.c.b16 %v1610, %v1609
    %v1671 = vpack.c.b16 %v1612, %v1611
    %v1672 = vpack.c.b16 %v1614, %v1613
    %v1673 = vpack.c.b16 %v1616, %v1615
    %v1674 = vpack.c.b16 %v1618, %v1617
    %v1675 = vpack.c.b16 %v1620, %v1619
    %v1676 = vpack.c.b16 %v1622, %v1621
    %v1677 = vpack.c.b16 %v1624, %v1623
    %v1678 = vpack.c.b16 %v1626, %v1625
    %v1679 = vpack.c.b16 %v1628, %v1627
    %v1680 = vpack.c.b16 %v1630, %v1629
    %v1681 = vpack.c.b16 %v1632, %v1631
    %v1682 = vpack.c.b16 %v1634, %v1633
    %v1683 = vpack.c.b16 %v1636, %v1635
    %v1684 = vpack.c.b16 %v1638, %v1637
    %v1685 = vpack.c.b16 %v1640, %v1639
    %v1686 = vpack.c.b16 %v1642, %v1641
    %v1687 = vpack.c.b16 %v1644, %v1643
    %v1688 = vpack.c.b16 %v1646, %v1645
    %v1689 = vpack.c.b16 %v1648, %v1647
    %v1690 = vpack.c.b16 %v1650, %v1649
    %v1691 = vpack.c.b16 %v1652, %v1651
    %v1692 = vpack.c.b16 %v1654, %v1653
    %v1693 = vpack.c.b16 %v1656, %v1655
    %v1694 = vpack.c.b16 %v1658, %v1657
    %v1695 = vpack.c.b16 %v1660, %v1659
    %v1696 = vpack.c.b16 %v1662, %v1661
    %v1697 = vpack.c.b16 %v1664, %v1663
    %v1698 = vpack.c.b16 %v1666, %v1665
    %1731 = vmatprep.subr.bf16.mxu0 0
    %1732 = vmatpush1.bf16.msra.mxu0 %v1674
    %1733 = vmatprep.subr.bf16.mxu0 0
    %1734 = vmatpush1.bf16.msra.mxu0 %v1673
    %1735 = vmatprep.subr.bf16.mxu0 0
    %1736 = vmatpush1.bf16.msra.mxu0 %v1672
    %1737 = vmatprep.subr.bf16.mxu0 0
    %1738 = vmatpush1.bf16.msra.mxu0 %v1671
    %1739 = vmatprep.subr.bf16.mxu0 0
    %1740 = vmatpush1.bf16.msra.mxu0 %v1670
    %1741 = vmatprep.subr.bf16.mxu0 0
    %1742 = vmatpush1.bf16.msra.mxu0 %v1669
    %1743 = vmatprep.subr.bf16.mxu0 0
    %1744 = vmatpush1.bf16.msra.mxu0 %v1668
    %1745 = vmatprep.subr.bf16.mxu0 0
    %1746 = vmatpush1.bf16.msra.mxu0 %v1667
    %1747 = vmatprep.subr.bf16.mxu0 0
    %1748 = vmatpush2.bf16.msra.mxu0 %v1682
    %1749 = vmatprep.subr.bf16.mxu0 0
    %1750 = vmatpush2.bf16.msra.mxu0 %v1681
    %1751 = vmatprep.subr.bf16.mxu0 0
    %1752 = vmatpush2.bf16.msra.mxu0 %v1680
    %1753 = vmatprep.subr.bf16.mxu0 0
    %1754 = vmatpush2.bf16.msra.mxu0 %v1679
    %1755 = vmatprep.subr.bf16.mxu0 0
    %1756 = vmatpush2.bf16.msra.mxu0 %v1678
    %1757 = vmatprep.subr.bf16.mxu0 0
    %1758 = vmatpush2.bf16.msra.mxu0 %v1677
    %1759 = vmatprep.subr.bf16.mxu0 0
    %1760 = vmatpush2.bf16.msra.mxu0 %v1676
    %1761 = vmatprep.subr.bf16.mxu0 0
    %1762 = vmatpush2.bf16.msra.mxu0 %v1675
    %1763 = vmatprep.mubr.bf16.mxu0 %v1465
    %1764 = vmatmul.mubr.bf16.gmra.mxu0 %v1464
    %v1765 = vpop.f32.mrf.mxu0
    %v1766 = vadd.f32 %v1537, %v1765
    %v1767 = vpop.f32.mrf.mxu0
    %v1768 = vpop.f32.mrf.mxu0
    %v1769 = vadd.f32 %v1537, %v1768
    %v1770 = vpop.f32.mrf.mxu0
    %1771 = vdwg.mxu0
    %1772 = vmatprep.subr.bf16.mxu0 0
    %1773 = vmatpush1.bf16.msra.mxu0 %v1690
    %1774 = vmatprep.subr.bf16.mxu0 0
    %1775 = vmatpush1.bf16.msra.mxu0 %v1689
    %1776 = vmatprep.subr.bf16.mxu0 0
    %1777 = vmatpush1.bf16.msra.mxu0 %v1688
    %1778 = vmatprep.subr.bf16.mxu0 0
    %1779 = vmatpush1.bf16.msra.mxu0 %v1687
    %1780 = vmatprep.subr.bf16.mxu0 0
    %1781 = vmatpush1.bf16.msra.mxu0 %v1686
    %1782 = vmatprep.subr.bf16.mxu0 0
    %1783 = vmatpush1.bf16.msra.mxu0 %v1685
    %1784 = vmatprep.subr.bf16.mxu0 0
    %1785 = vmatpush1.bf16.msra.mxu0 %v1684
    %1786 = vmatprep.subr.bf16.mxu0 0
    %1787 = vmatpush1.bf16.msra.mxu0 %v1683
    %1788 = vmatprep.subr.bf16.mxu0 0
    %1789 = vmatpush2.bf16.msra.mxu0 %v1698
    %1790 = vmatprep.subr.bf16.mxu0 0
    %1791 = vmatpush2.bf16.msra.mxu0 %v1697
    %1792 = vmatprep.subr.bf16.mxu0 0
    %1793 = vmatpush2.bf16.msra.mxu0 %v1696
    %1794 = vmatprep.subr.bf16.mxu0 0
    %1795 = vmatpush2.bf16.msra.mxu0 %v1695
    %1796 = vmatprep.subr.bf16.mxu0 0
    %1797 = vmatpush2.bf16.msra.mxu0 %v1694
    %1798 = vmatprep.subr.bf16.mxu0 0
    %1799 = vmatpush2.bf16.msra.mxu0 %v1693
    %1800 = vmatprep.subr.bf16.mxu0 0
    %1801 = vmatpush2.bf16.msra.mxu0 %v1692
    %1802 = vmatprep.subr.bf16.mxu0 0
    %1803 = vmatpush2.bf16.msra.mxu0 %v1691
    %1804 = vmatprep.mubr.bf16.mxu0 %v1467
    %1805 = vmatmul.mubr.bf16.gmra.mxu0 %v1466
    %v1806 = vpop.f32.mrf.mxu0
    %v1807 = vadd.f32 %v1766, %v1806
    %v1808 = vpop.f32.mrf.mxu0
    %v1809 = vpop.f32.mrf.mxu0
    %v1810 = vadd.f32 %v1769, %v1809
    %v1811 = vpop.f32.mrf.mxu0
    %1812 = vdwg.mxu0
    %1813 = vst [vmem:[#allocation11] sm:$0xff] %v1807
    %1814 = vst [vmem:[#allocation11 + $0x8] sm:$0xff] %v1810
    // Predicated region
    $region50: #{tpu_custom_call.1} parent=1 // pred_check
      _
    $region51: #{tpu_custom_call.1} parent=1 // pred_check_branch
      %1816 = sbr.rel (0) target = $region53
    $region52: #{tpu_custom_call.1} parent=1 // pred_region
      %s1818 = ssub.s32 256, 256
      %1819 = vsyncadd [#allocation4], %s1818
      %s1820 = sshll.u32 [#allocation11], 4
      %s1821 = int_to_ptr.vmem [resolvable:$true] %s1820
      %1826 = dma.vmem_to_hbm [thread:$0]  %s1821, 256, %s7, [#allocation4], 128, 128, 8
    $region53: #{tpu_custom_call.1} parent=1 // pred_fallthru
      _
    // Predicated region
    $region54: #{tpu_custom_call.1} parent=1 // pred_check
      _
    $region55: #{tpu_custom_call.1} parent=1 // pred_check_branch
      %1828 = sbr.rel (0) target = $region57
    $region56: #{tpu_custom_call.1} parent=1 // pred_region
      %1829 = dma.done [#allocation4], 256
    $region57: #{tpu_custom_call.1} parent=1 // pred_fallthru
      _
    %1830 = vsyncpa [#allocation3], 1
    %1831 = vsyncpa [#allocation6], 1
    %1832 = vsyncpa [#allocation9], 1
    %1833 = vsyncpa [#allocation4], 1

</llo_original>
